<compile_context>
chip_gen: v7x
topology: tpu7x:2x2x1
jax: 0.10.0
libtpu: 0.0.40
codegen_flags: <defaults>
</compile_context>

<pallas_src>
import math
from functools import partial

import jax
import jax.numpy as jnp
from jax.experimental import pallas as pl
from jax.experimental.pallas import tpu as pltpu


def _round_up(a, b):
    return (a + b - 1) // b * b


def _cdiv(a, b):
    return (a + b - 1) // b


# --------------------------------------------------------------------------- #
# Kernel
# --------------------------------------------------------------------------- #
def expert_kernel(x_ref, w1_ref, b1_ref, w2_ref, b2_ref, wp_ref, bp_ref,
                  o_ref, *scratch):
    """One (token-tile, I-tile) grid step of the SwiGLU expert.

    x_ref   : (tm, E)      token tile (native dtype, fed straight to the MXU)
    w1_ref  : (E, ti)      gate-projection slab for this I-tile
    b1_ref  : (1, ti)      gate bias slab
    w2_ref  : (E, ti)      up-projection slab for this I-tile
    b2_ref  : (1, ti)      up bias slab
    wp_ref  : (ti, E)      down-projection slab for this I-tile
    bp_ref  : (1, E)       down-projection bias (folded into acc init)
    o_ref   : (tm, E)      output tile (resident across the I axis)
    scratch : optional (tm, E) f32 accumulator (only when o_ref is not f32)
    """
    acc_ref = scratch[0] if scratch else o_ref  # f32 output: accumulate in place
    j = pl.program_id(1)

    @pl.when(j == 0)
    def _init():
        # Fold the proj bias into the accumulator init (no per-step broadcast).
        acc_ref[...] = jnp.broadcast_to(
            bp_ref[...].astype(jnp.float32), acc_ref.shape)

    x = x_ref[...]
    # Gate / up projections: native-dtype MXU inputs, f32 accumulation.
    h1 = jnp.dot(x, w1_ref[...], preferred_element_type=jnp.float32)
    h1 = h1 + b1_ref[...].astype(jnp.float32)
    h2 = jnp.dot(x, w2_ref[...], preferred_element_type=jnp.float32)
    h2 = h2 + b2_ref[...].astype(jnp.float32)

    # SwiGLU gating in f32 (EUP sigmoid + VPU muls).
    g = (h1 * jax.nn.sigmoid(h1)) * h2

    # Partial down-projection for this I-tile, accumulated in f32.
    acc_ref[...] += jnp.dot(g.astype(wp_ref.dtype), wp_ref[...],
                            preferred_element_type=jnp.float32)

    if scratch:
        @pl.when(j == pl.num_programs(1) - 1)
        def _finalize():
            # Dropout: eval-mode identity.
            o_ref[...] = acc_ref[...].astype(o_ref.dtype)


# --------------------------------------------------------------------------- #
# Generation-aware configuration
# --------------------------------------------------------------------------- #
def _tpu_generation():
    """Best-effort hardware query (device kind string, VMEM capacity bytes)."""
    kind = ""
    try:
        kind = jax.devices()[0].device_kind.lower()
    except Exception:
        pass
    vmem_cap = None
    try:
        vmem_cap = int(pltpu.get_tpu_info().vmem_capacity_bytes)
    except Exception:
        pass
    return kind, vmem_cap


def _auto_config(kind, vmem_cap):
    """Returns (tm_target, ti_req, vmem_budget_bytes, multi_core)."""
    is_v7 = "v7" in kind
    is_v5 = "v5" in kind
    is_v6 = "v6" in kind
    if vmem_cap is None:
        # Unknown: assume the smallest VMEM (v7x per-TC = 64 MiB) to be safe.
        vmem_cap = (128 if (is_v5 or is_v6) else 64) * 1024 * 1024
    if vmem_cap >= 100 * 1024 * 1024:
        # v5e / v6e class (128 MiB physical VMEM, single TensorCore).
        budget = 100 * 1024 * 1024
        tm_target = 512 if is_v5 else 768   # v5e needs ~240 flop/B; v6e ~650
        ti_req = 512
    else:
        # v7x class (64 MiB per TC): smaller ti frees VMEM for a big-enough tm.
        budget = 52 * 1024 * 1024
        tm_target = 448
        ti_req = 256
    return tm_target, ti_req, budget, is_v7


def _pick_ti(I, ti_req):
    """Largest multiple of 128 that divides I and is <= ti_req (None if I%128)."""
    t = (max(128, min(ti_req, I)) // 128) * 128
    while t >= 128:
        if I % t == 0:
            return t
        t -= 128
    return None


def _vmem_estimate(tm, ti, E, in_item, out_item, use_scratch):
    """Double-buffered blocks + f32 intermediates + accumulator + slack."""
    blocks = 2 * (tm * E * in_item          # x
                  + 2 * E * ti * in_item    # w1 + w2
                  + 2 * ti * in_item        # b1 + b2
                  + ti * E * in_item        # wp
                  + E * in_item             # bp
                  + tm * E * out_item)      # out
    interm = 3 * tm * ti * 4                # h1, h2, g (f32)
    acc = tm * E * 4 if use_scratch else 0
    return blocks + interm + acc + (1 << 20)  # ~1 MiB slack for compiler temps


# --------------------------------------------------------------------------- #
# Wrapper
# --------------------------------------------------------------------------- #
def expert_forward(x, w1, b1, w2, b2, wp, bp, *, tm=None, ti=None):
    """x: (..., E) -> (..., E). Flattens leading dims to a token axis.

    Weights are pre-transposed: w1/w2 (E, I), wp (I, E); biases (1, N).
    tm/ti: optional overrides; by default they are chosen per TPU generation.
    """
    orig_shape = x.shape
    E = orig_shape[-1]
    I = w1.shape[1]
    x2 = x.reshape(-1, E)
    M = x2.shape[0]

    in_item = jnp.dtype(x.dtype).itemsize
    out_item = in_item
    use_scratch = (jnp.dtype(x.dtype) != jnp.float32)

    kind, vmem_cap = _tpu_generation()
    tm_target, ti_req, vmem_budget, is_v7 = _auto_config(kind, vmem_cap)
    if tm is not None:
        tm_target = tm
    if ti is not None:
        ti_req = ti

    # --- intermediate-dim tiling -------------------------------------------
    Ip = I
    ti_sel = _pick_ti(I, ti_req)
    if ti_sel is None:
        # Rare fallback (I not a multiple of 128): zero-pad the intermediate dim
        # so the weight block never balloons to the full (E, I). Padded gate/up
        # columns produce silu(0)*0 = 0 and padded wp rows are zero -> exact.
        Ip = _round_up(I, 128)
        pad = Ip - I
        w1 = jnp.pad(w1, ((0, 0), (0, pad)))
        w2 = jnp.pad(w2, ((0, 0), (0, pad)))
        b1 = jnp.pad(b1, ((0, 0), (0, pad)))
        b2 = jnp.pad(b2, ((0, 0), (0, pad)))
        wp = jnp.pad(wp, ((0, pad), (0, 0)))
        ti_sel = _pick_ti(Ip, ti_req)
    ti = ti_sel
    n_i = Ip // ti

    # --- token tiling --------------------------------------------------------
    tm = max(8, min(_round_up(tm_target, 8), _round_up(M, 8)))
    # Shrink tm until the (intermediate-inclusive) VMEM estimate fits the budget.
    while tm > 8 and _vmem_estimate(tm, ti, E, in_item, out_item,
                                    use_scratch) > 0.85 * vmem_budget:
        tm = max(8, _round_up(tm - (64 if tm > 64 else 8), 8))
    # v7x has 2 TensorCores: keep >= 2 token tiles so megacore sharding balances.
    if is_v7 and M >= 16 and _cdiv(M, tm) < 2:
        tm = max(8, _round_up(_cdiv(M, 2), 8))

    Mp = _round_up(M, tm)
    if Mp != M:
        x2 = jnp.pad(x2, ((0, Mp - M), (0, 0)))

    grid = (Mp // tm, n_i)
    scratch_shapes = [pltpu.VMEM((tm, E), jnp.float32)] if use_scratch else []

    # Advisory cost estimate for XLA's scheduler.
    n_token_tiles = Mp // tm
    weight_bytes = int((w1.size + w2.size + b1.size + b2.size
                        + wp.size + bp.size) * in_item)
    cost = pl.CostEstimate(
        flops=int(6 * Mp * E * Ip),          # gate + up + down projections
        transcendentals=int(Mp * Ip),        # sigmoid
        bytes_accessed=int(Mp * E * in_item + Mp * E * out_item
                           + n_token_tiles * weight_bytes),
    )

    out = pl.pallas_call(
        expert_kernel,
        out_shape=jax.ShapeDtypeStruct((Mp, E), x.dtype),
        grid_spec=pltpu.PrefetchScalarGridSpec(
            num_scalar_prefetch=0,
            grid=grid,
            in_specs=[
                pl.BlockSpec((tm, E), lambda i, j: (i, 0)),     # x tile
                pl.BlockSpec((E, ti), lambda i, j: (0, j)),     # W1 slab
                pl.BlockSpec((1, ti), lambda i, j: (0, j)),     # b1 slab
                pl.BlockSpec((E, ti), lambda i, j: (0, j)),     # W2 slab
                pl.BlockSpec((1, ti), lambda i, j: (0, j)),     # b2 slab
                pl.BlockSpec((ti, E), lambda i, j: (j, 0)),     # Wp slab
                pl.BlockSpec((1, E), lambda i, j: (0, 0)),      # bp
            ],
            out_specs=pl.BlockSpec((tm, E), lambda i, j: (i, 0)),
            scratch_shapes=scratch_shapes,
        ),
        compiler_params=pltpu.CompilerParams(
            dimension_semantics=("parallel", "arbitrary"),
            vmem_limit_bytes=int(vmem_budget),
        ),
        cost_estimate=cost,
    )(x2, w1, b1, w2, b2, wp, bp)

    if Mp != M:
        out = out[:M]
    return out.reshape(orig_shape)


# --------------------------------------------------------------------------- #
# Reference, init, demo
# --------------------------------------------------------------------------- #
def expert_reference(x, w1, b1, w2, b2, wp, bp):
    """Plain-JAX reference matching the PyTorch forward (eval mode)."""
    xf = x.astype(jnp.float32)
    h1 = xf @ w1.astype(jnp.float32) + b1.astype(jnp.float32)
    h2 = xf @ w2.astype(jnp.float32) + b2.astype(jnp.float32)
    g = jax.nn.silu(h1) * h2
    # The kernel feeds the gated activations to the MXU in the weight dtype.
    g = g.astype(wp.dtype).astype(jnp.float32)
    out = g @ wp.astype(jnp.float32) + bp.astype(jnp.float32)
    return out.astype(x.dtype)


def init_linear(key, in_features, out_features, dtype=jnp.float32):
    """Deterministic init mimicking nn.Linear defaults (uniform +/- 1/sqrt(fan_in)).
    Returns weight already transposed to (in_features, out_features)."""
    kw, kb = jax.random.split(key)
    bound = 1.0 / math.sqrt(in_features)
    w = jax.random.uniform(kw, (in_features, out_features), dtype,
                           minval=-bound, maxval=bound)
    b = jax.random.uniform(kb, (1, out_features), dtype,
                           minval=-bound, maxval=bound)
    return w, b


if __name__ == "__main__":
    # Small-but-lane-dense config: embedding_dim=128, expert_inter_dim=512,
    # ffn_bias=True, ffn_dropout=0.0 (eval mode). Input: batch=2, seq=128.
    embedding_dim = 128
    expert_inter_dim = 512
    batch, seq = 2, 128

    key = jax.random.PRNGKey(0)
    kx, k1, k2, kp = jax.random.split(key, 4)

    x = jax.random.normal(kx, (batch, seq, embedding_dim), jnp.float32)
    w1, b1 = init_linear(k1, embedding_dim, expert_inter_dim)   # ln1
    w2, b2 = init_linear(k2, embedding_dim, expert_inter_dim)   # ln2
    wp, bp = init_linear(kp, expert_inter_dim, embedding_dim)   # proj

    fwd = jax.jit(expert_forward)   # generation-aware auto tiling

    # f32 path (accumulates directly into the output block, no scratch).
    out = jax.block_until_ready(fwd(x, w1, b1, w2, b2, wp, bp))
    ref = expert_reference(x, w1, b1, w2, b2, wp, bp)
    assert out.shape == x.shape, (out.shape, x.shape)
    err = float(jnp.max(jnp.abs(out - ref)))
    assert err < 1e-3, err

    # bf16 path: native-dtype MXU inputs, f32 scratch accumulator.
    cast = lambda t: t.astype(jnp.bfloat16)
    outb = jax.block_until_ready(
        fwd(cast(x), cast(w1), cast(b1), cast(w2), cast(b2), cast(wp), cast(bp)))
    refb = expert_reference(cast(x), cast(w1), cast(b1), cast(w2), cast(b2),
                            cast(wp), cast(bp))
    assert outb.dtype == jnp.bfloat16
    errb = float(jnp.max(jnp.abs(outb.astype(jnp.float32)
                                 - refb.astype(jnp.float32))))
    assert errb < 5e-2, errb

    # Ragged token count exercises the zero-padding path.
    xr = x[:, :72, :]                       # 144 tokens, not a tile multiple
    outr = jax.block_until_ready(fwd(xr, w1, b1, w2, b2, wp, bp))
    refr = expert_reference(xr, w1, b1, w2, b2, wp, bp)
    assert outr.shape == xr.shape
    errr = float(jnp.max(jnp.abs(outr - refr)))
    assert errr < 1e-3, errr

    print("KERNEL_OK")
</pallas_src>

<mosaic_0001>
module attributes {stable_mosaic.version = 11 : i64} {
  func.func @expert_kernel(%arg0: i32, %arg1: i32, %arg2: memref<256x128xf32, #tpu.memory_space<vmem>>, %arg3: memref<128x256xf32, #tpu.memory_space<vmem>>, %arg4: memref<1x256xf32, #tpu.memory_space<vmem>>, %arg5: memref<128x256xf32, #tpu.memory_space<vmem>>, %arg6: memref<1x256xf32, #tpu.memory_space<vmem>>, %arg7: memref<256x128xf32, #tpu.memory_space<vmem>>, %arg8: memref<1x128xf32, #tpu.memory_space<vmem>>, %arg9: memref<256x128xf32, #tpu.memory_space<vmem>>) attributes {dimension_semantics = [#tpu.dimension_semantics<parallel>, #tpu.dimension_semantics<arbitrary>], iteration_bounds = array<i64: 1, 2>, scalar_prefetch = 0 : i64, scratch_operands = 0 : i64, tpu.core_type = #tpu.core_type<tc>, window_params = [{transform_indices = @transform_0, window_bounds = array<i64: 256, 128>}, {transform_indices = @transform_1, window_bounds = array<i64: 128, 256>}, {transform_indices = @transform_2, window_bounds = array<i64: 1, 256>}, {transform_indices = @transform_3, window_bounds = array<i64: 128, 256>}, {transform_indices = @transform_4, window_bounds = array<i64: 1, 256>}, {transform_indices = @transform_5, window_bounds = array<i64: 256, 128>}, {pipeline_mode = #tpu.pipeline_mode<synchronous>, transform_indices = @transform_6, window_bounds = array<i64: 1, 128>}, {transform_indices = @transform_7, window_bounds = array<i64: 256, 128>}]} {
    %c0_i32 = arith.constant 0 : i32
    %0 = arith.cmpi eq, %arg1, %c0_i32 : i32
    %1 = arith.extui %0 : i1 to i32
    %c0_i32_0 = arith.constant 0 : i32
    %2 = arith.cmpi ne, %1, %c0_i32_0 : i32
    scf.if %2 {
      %c0_19 = arith.constant 0 : index
      %c0_20 = arith.constant 0 : index
      %26 = vector.load %arg8[%c0_19, %c0_20] : memref<1x128xf32, #tpu.memory_space<vmem>>, vector<1x128xf32>
      %27 = vector.shape_cast %26 : vector<1x128xf32> to vector<1x128xf32>
      %28 = vector.broadcast %27 : vector<1x128xf32> to vector<256x128xf32>
      %c0_21 = arith.constant 0 : index
      %c0_22 = arith.constant 0 : index
      %29 = vector.load %arg9[%c0_21, %c0_22] : memref<256x128xf32, #tpu.memory_space<vmem>>, vector<256x128xf32>
      tpu.vector_store %arg9[%c0_21, %c0_22], %28 {strides = array<i32>} : memref<256x128xf32, #tpu.memory_space<vmem>>, vector<256x128xf32>,
    } else {
    }
    %c0 = arith.constant 0 : index
    %c0_1 = arith.constant 0 : index
    %3 = vector.load %arg2[%c0, %c0_1] : memref<256x128xf32, #tpu.memory_space<vmem>>, vector<256x128xf32>
    %c0_2 = arith.constant 0 : index
    %c0_3 = arith.constant 0 : index
    %4 = vector.load %arg3[%c0_2, %c0_3] : memref<128x256xf32, #tpu.memory_space<vmem>>, vector<128x256xf32>
    %cst = arith.constant dense<0.000000e+00> : vector<256x256xf32>
    %5 = tpu.matmul %3, %4, %cst {dimension_numbers = #tpu.dot_dimension_numbers<[1], [0], [0], [1], [0, 0, 1, 1], [], []>} : vector<256x128xf32>, vector<128x256xf32>, vector<256x256xf32> -> vector<256x256xf32>
    %c0_4 = arith.constant 0 : index
    %c0_5 = arith.constant 0 : index
    %6 = vector.load %arg4[%c0_4, %c0_5] : memref<1x256xf32, #tpu.memory_space<vmem>>, vector<1x256xf32>
    %7 = vector.broadcast %6 : vector<1x256xf32> to vector<256x256xf32>
    %8 = arith.addf %5, %7 : vector<256x256xf32>
    %c0_6 = arith.constant 0 : index
    %c0_7 = arith.constant 0 : index
    %9 = vector.load %arg5[%c0_6, %c0_7] : memref<128x256xf32, #tpu.memory_space<vmem>>, vector<128x256xf32>
    %cst_8 = arith.constant dense<0.000000e+00> : vector<256x256xf32>
    %10 = tpu.matmul %3, %9, %cst_8 {dimension_numbers = #tpu.dot_dimension_numbers<[1], [0], [0], [1], [0, 0, 1, 1], [], []>} : vector<256x128xf32>, vector<128x256xf32>, vector<256x256xf32> -> vector<256x256xf32>
    %c0_9 = arith.constant 0 : index
    %c0_10 = arith.constant 0 : index
    %11 = vector.load %arg6[%c0_9, %c0_10] : memref<1x256xf32, #tpu.memory_space<vmem>>, vector<1x256xf32>
    %12 = vector.broadcast %11 : vector<1x256xf32> to vector<256x256xf32>
    %13 = arith.addf %10, %12 : vector<256x256xf32>
    %14 = arith.negf %8 : vector<256x256xf32>
    %15 = math.exp %14 : vector<256x256xf32>
    %cst_11 = arith.constant 1.000000e+00 : f32
    %16 = vector.broadcast %cst_11 : f32 to vector<256x256xf32>
    %17 = arith.addf %16, %15 : vector<256x256xf32>
    %18 = arith.divf %16, %17 : vector<256x256xf32>
    %19 = arith.mulf %8, %18 : vector<256x256xf32>
    %20 = arith.mulf %19, %13 : vector<256x256xf32>
    %c0_12 = arith.constant 0 : index
    %c0_13 = arith.constant 0 : index
    %21 = vector.load %arg9[%c0_12, %c0_13] : memref<256x128xf32, #tpu.memory_space<vmem>>, vector<256x128xf32>
    %c0_14 = arith.constant 0 : index
    %c0_15 = arith.constant 0 : index
    %22 = vector.load %arg7[%c0_14, %c0_15] : memref<256x128xf32, #tpu.memory_space<vmem>>, vector<256x128xf32>
    %cst_16 = arith.constant dense<0.000000e+00> : vector<256x128xf32>
    %23 = tpu.matmul %20, %22, %cst_16 {dimension_numbers = #tpu.dot_dimension_numbers<[1], [0], [0], [1], [0, 0, 1, 1], [], []>} : vector<256x256xf32>, vector<256x128xf32>, vector<256x128xf32> -> vector<256x128xf32>
    %24 = arith.addf %21, %23 : vector<256x128xf32>
    %c0_17 = arith.constant 0 : index
    %c0_18 = arith.constant 0 : index
    %25 = vector.load %arg9[%c0_17, %c0_18] : memref<256x128xf32, #tpu.memory_space<vmem>>, vector<256x128xf32>
    tpu.vector_store %arg9[%c0_17, %c0_18], %24 {strides = array<i32>} : memref<256x128xf32, #tpu.memory_space<vmem>>, vector<256x128xf32>,
    return
  }
  func.func @transform_0(%arg0: i32, %arg1: i32) -> (i32, i32) {
    %c0_i32 = arith.constant 0 : i32
    %c0_i32_0 = arith.constant 0 : i32
    return %arg0, %c0_i32 : i32, i32
  }
  func.func @transform_1(%arg0: i32, %arg1: i32) -> (i32, i32) {
    %c0_i32 = arith.constant 0 : i32
    %c0_i32_0 = arith.constant 0 : i32
    return %c0_i32, %arg1 : i32, i32
  }
  func.func @transform_2(%arg0: i32, %arg1: i32) -> (i32, i32) {
    %c0_i32 = arith.constant 0 : i32
    %c0_i32_0 = arith.constant 0 : i32
    return %c0_i32, %arg1 : i32, i32
  }
  func.func @transform_3(%arg0: i32, %arg1: i32) -> (i32, i32) {
    %c0_i32 = arith.constant 0 : i32
    %c0_i32_0 = arith.constant 0 : i32
    return %c0_i32, %arg1 : i32, i32
  }
  func.func @transform_4(%arg0: i32, %arg1: i32) -> (i32, i32) {
    %c0_i32 = arith.constant 0 : i32
    %c0_i32_0 = arith.constant 0 : i32
    return %c0_i32, %arg1 : i32, i32
  }
  func.func @transform_5(%arg0: i32, %arg1: i32) -> (i32, i32) {
    %c0_i32 = arith.constant 0 : i32
    %c0_i32_0 = arith.constant 0 : i32
    return %arg1, %c0_i32 : i32, i32
  }
  func.func @transform_6(%arg0: i32, %arg1: i32) -> (i32, i32) {
    %c0_i32 = arith.constant 0 : i32
    %c0_i32_0 = arith.constant 0 : i32
    %c0_i32_1 = arith.constant 0 : i32
    return %c0_i32, %c0_i32_0 : i32, i32
  }
  func.func @transform_7(%arg0: i32, %arg1: i32) -> (i32, i32) {
    %c0_i32 = arith.constant 0 : i32
    %c0_i32_0 = arith.constant 0 : i32
    return %arg0, %c0_i32 : i32, i32
  }
}

</mosaic_0001>

<llo_original>
// kernel: expert_forward.1
$region0: #{expert_forward.1}
  #allocation0 [shape = 'u32[]', space=smem, size = 0x4, offset = 0x4, fixed_abs, tag = 'smem constant byte address 0x4 - core index']
  #allocation1 [shape = 'u32[144,128]{1,0:T(1,128)}', space=vmem, size = 0x12000, scoped, tag = 'internal scratch']
  %s0 = inlined_call_operand.hbm [shape: f32[256,128], index: 0, kind: input, shape index: {}]
  %s1 = inlined_call_operand.hbm [shape: f32[128,512], index: 1, kind: input, shape index: {}]
  %s2 = inlined_call_operand.vmem [shape: f32[1,512], index: 2, kind: input, shape index: {}]
  %s3 = inlined_call_operand.hbm [shape: f32[128,512], index: 3, kind: input, shape index: {}]
  %s4 = inlined_call_operand.vmem [shape: f32[1,512], index: 4, kind: input, shape index: {}]
  %s5 = inlined_call_operand.hbm [shape: f32[512,128], index: 5, kind: input, shape index: {}]
  %s6 = inlined_call_operand.vmem [shape: f32[1,128], index: 6, kind: input, shape index: {}]
  %s7 = inlined_call_operand.hbm [shape: f32[256,128], index: 7, kind: output, shape index: {}]
  %s8 = sld [smem:[#allocation0]]
  $region81: #{expert_forward.1} parent=0
    _
  %s10 = ssub.s32 1, %s8
  %s11 = scalar_select 0, %s10, %s8
  $region1: #{expert_forward.1} parent=0
    #allocation2 [shape = 'u8[131072]{0}', space=vmem, size = 0x20000, scoped, tag = 'input window, operand 0, single buffered']
    #allocation3 [shape = 's32[2]{0}', space=sflag, size = 0x8, scoped, tag = 'scoped memory for expert_forward.1']
    #allocation4 [shape = 's32[2]{0}', space=sflag, size = 0x8, scoped, tag = 'scoped memory for expert_forward.1']
    #allocation5 [shape = 'u8[262144]{0}', space=vmem, size = 0x40000, scoped, tag = 'input window, operand 1']
    #allocation6 [shape = 's32[2]{0}', space=sflag, size = 0x8, scoped, tag = 'scoped memory for expert_forward.1']
    #allocation7 [shape = 'u8[262144]{0}', space=vmem, size = 0x40000, scoped, tag = 'input window, operand 3']
    #allocation8 [shape = 'u8[262144]{0}', space=vmem, size = 0x40000, scoped, tag = 'input window, operand 5']
    #allocation9 [shape = 's32[2]{0}', space=sflag, size = 0x8, scoped, tag = 'scoped memory for expert_forward.1']
    #allocation10 [shape = 'u8[131072]{0}', space=vmem, size = 0x20000, scoped, tag = 'output window, operand 0, single buffered']
    %12 = vsyncpa [#allocation3], 0
    %13 = vsyncpa [#allocation6], 0
    %s14 = scalar_lea.sflag [#allocation6], 1
    %15 = vsyncpa %s14, 0
    %16 = vsyncpa [#allocation9], 0
    %s17 = scalar_lea.sflag [#allocation9], 1
    %18 = vsyncpa %s17, 0
    %19 = vsyncpa [#allocation4], 0
    loop: start=0, step=1, limit=4
    $region2: #{expert_forward.1} parent=1 // loop_pre_header
      _
    $region3: #{expert_forward.1} parent=1 // loop_header
      %s21 = sphi 0, %s25
      %p22 = scmp.ge.s32.totalorder %s21, 4
      %s28 = sphi 0, %s40
      %s29 = sphi 0, %s36
      %s30 = sphi 0, %s28
      %s31 = sphi 0, %s29
      %s32 = sphi 0, %s30
      %s33 = sphi 0, %s31
      %s43 = sphi 0, %s45
      %s46 = sphi 0, %s43
      %s47 = sphi 0, %s46
      %s63 = sphi 0, %s47
      %s69 = sphi 0, %s71
      %s72 = sphi 0, %s69
      %s73 = sphi 0, %s72
      %s89 = sphi 0, %s73
      %s95 = sphi 0, %s97
      %s98 = sphi 0, %s95
      %s99 = sphi 0, %s98
      %s115 = sphi 0, %s99
      %s121 = sphi 0, %s123
      %s124 = sphi 0, %s121
      %s125 = sphi 0, %s124
      %s141 = sphi 0, %s125
      %s147 = sphi 0, %s149
      %s150 = sphi 0, %s147
      %s151 = sphi 0, %s150
      %s167 = sphi 0, %s151
      %s173 = sphi 0, %s175
      %s176 = sphi 0, %s173
      %s177 = sphi 0, %s176
      %s193 = sphi 0, %s177
      %s197 = sphi 0, %s197
      %s199 = sphi 0, %s197
      %s200 = sphi 0, %s199
      %s214 = sphi 0, %s200
      %s220 = sphi 0, %s222
      %s223 = sphi 0, %s220
      %s224 = sphi 0, %s223
      %s240 = sphi 0, %s224
    $region4: #{expert_forward.1} parent=1 // loop_header_branch
      %24 = sbr.rel (%p22) target = $region8
    $region5: #{expert_forward.1} parent=1 // loop_body
      %s26 = ssub.s32 %s21, 1
      %s27 = ssub.s32 %s21, 2
      %s34 = sadd.s32 1, %s29
      %p35 = scmp.ge.s32.totalorder %s34, 2
      %s36 = scalar_select %p35, 0, %s34
      %s37 = sadd.s32 1, %s28
      %s38 = scalar_select %p35, %s37, %s28
      %p39 = scmp.ge.s32.totalorder %s38, 1
      %s40 = scalar_select %p39, 0, %s38
      %s41 = ssub.s32 %s28, %s40
      %p42 = scmp.eq.s32.totalorder %s41, 0
      %s44 = sadd.s32 %s43, 1
      %s45 = scalar_select %p42, %s43, %s44
      %p48 = pneg %p42
      %p49 = scmp.eq.s32.totalorder %s21, 1
      %p50 = por %p48, %p49
      %p51 = scmp.ne.s32.totalorder %s43, %s46
      %p52 = scmp.eq.s32.totalorder %s21, 0
      %p53 = por %p51, %p52
      %p54 = scmp.ne.s32.totalorder %s43, %s46
      %p55 = scmp.eq.s32.totalorder %s26, 1
      %p56 = por %p54, %p55
      %p57 = scmp.ne.s32.totalorder %s46, %s47
      %p58 = scmp.eq.s32.totalorder %s26, 0
      %p59 = por %p57, %p58
      %p60 = scmp.ne.s32.totalorder %s46, %s47
      %p61 = scmp.eq.s32.totalorder %s27, 1
      %p62 = por %p60, %p61
      %p64 = scmp.ne.s32.totalorder %s47, %s63
      %p65 = scmp.eq.s32.totalorder %s27, 0
      %p66 = por %p64, %p65
      %s67 = ssub.s32 %s29, %s36
      %p68 = scmp.eq.s32.totalorder %s67, 0
      %s70 = sadd.s32 %s69, 1
      %s71 = scalar_select %p68, %s69, %s70
      %p74 = pneg %p68
      %p75 = scmp.eq.s32.totalorder %s21, 1
      %p76 = por %p74, %p75
      %p77 = scmp.ne.s32.totalorder %s69, %s72
      %p78 = scmp.eq.s32.totalorder %s21, 0
      %p79 = por %p77, %p78
      %p80 = scmp.ne.s32.totalorder %s69, %s72
      %p81 = scmp.eq.s32.totalorder %s26, 1
      %p82 = por %p80, %p81
      %p83 = scmp.ne.s32.totalorder %s72, %s73
      %p84 = scmp.eq.s32.totalorder %s26, 0
      %p85 = por %p83, %p84
      %p86 = scmp.ne.s32.totalorder %s72, %s73
      %p87 = scmp.eq.s32.totalorder %s27, 1
      %p88 = por %p86, %p87
      %p90 = scmp.ne.s32.totalorder %s73, %s89
      %p91 = scmp.eq.s32.totalorder %s27, 0
      %p92 = por %p90, %p91
      %s93 = ssub.s32 %s29, %s36
      %p94 = scmp.eq.s32.totalorder %s93, 0
      %s96 = sadd.s32 %s95, 1
      %s97 = scalar_select %p94, %s95, %s96
      %p100 = pneg %p94
      %p101 = scmp.eq.s32.totalorder %s21, 1
      %p102 = por %p100, %p101
      %p103 = scmp.ne.s32.totalorder %s95, %s98
      %p104 = scmp.eq.s32.totalorder %s21, 0
      %p105 = por %p103, %p104
      %p106 = scmp.ne.s32.totalorder %s95, %s98
      %p107 = scmp.eq.s32.totalorder %s26, 1
      %p108 = por %p106, %p107
      %p109 = scmp.ne.s32.totalorder %s98, %s99
      %p110 = scmp.eq.s32.totalorder %s26, 0
      %p111 = por %p109, %p110
      %p112 = scmp.ne.s32.totalorder %s98, %s99
      %p113 = scmp.eq.s32.totalorder %s27, 1
      %p114 = por %p112, %p113
      %p116 = scmp.ne.s32.totalorder %s99, %s115
      %p117 = scmp.eq.s32.totalorder %s27, 0
      %p118 = por %p116, %p117
      %s119 = ssub.s32 %s29, %s36
      %p120 = scmp.eq.s32.totalorder %s119, 0
      %s122 = sadd.s32 %s121, 1
      %s123 = scalar_select %p120, %s121, %s122
      %p126 = pneg %p120
      %p127 = scmp.eq.s32.totalorder %s21, 1
      %p128 = por %p126, %p127
      %p129 = scmp.ne.s32.totalorder %s121, %s124
      %p130 = scmp.eq.s32.totalorder %s21, 0
      %p131 = por %p129, %p130
      %p132 = scmp.ne.s32.totalorder %s121, %s124
      %p133 = scmp.eq.s32.totalorder %s26, 1
      %p134 = por %p132, %p133
      %p135 = scmp.ne.s32.totalorder %s124, %s125
      %p136 = scmp.eq.s32.totalorder %s26, 0
      %p137 = por %p135, %p136
      %p138 = scmp.ne.s32.totalorder %s124, %s125
      %p139 = scmp.eq.s32.totalorder %s27, 1
      %p140 = por %p138, %p139
      %p142 = scmp.ne.s32.totalorder %s125, %s141
      %p143 = scmp.eq.s32.totalorder %s27, 0
      %p144 = por %p142, %p143
      %s145 = ssub.s32 %s29, %s36
      %p146 = scmp.eq.s32.totalorder %s145, 0
      %s148 = sadd.s32 %s147, 1
      %s149 = scalar_select %p146, %s147, %s148
      %p152 = pneg %p146
      %p153 = scmp.eq.s32.totalorder %s21, 1
      %p154 = por %p152, %p153
      %p155 = scmp.ne.s32.totalorder %s147, %s150
      %p156 = scmp.eq.s32.totalorder %s21, 0
      %p157 = por %p155, %p156
      %p158 = scmp.ne.s32.totalorder %s147, %s150
      %p159 = scmp.eq.s32.totalorder %s26, 1
      %p160 = por %p158, %p159
      %p161 = scmp.ne.s32.totalorder %s150, %s151
      %p162 = scmp.eq.s32.totalorder %s26, 0
      %p163 = por %p161, %p162
      %p164 = scmp.ne.s32.totalorder %s150, %s151
      %p165 = scmp.eq.s32.totalorder %s27, 1
      %p166 = por %p164, %p165
      %p168 = scmp.ne.s32.totalorder %s151, %s167
      %p169 = scmp.eq.s32.totalorder %s27, 0
      %p170 = por %p168, %p169
      %s171 = ssub.s32 %s29, %s36
      %p172 = scmp.eq.s32.totalorder %s171, 0
      %s174 = sadd.s32 %s173, 1
      %s175 = scalar_select %p172, %s173, %s174
      %p178 = pneg %p172
      %p179 = scmp.eq.s32.totalorder %s21, 1
      %p180 = por %p178, %p179
      %p181 = scmp.ne.s32.totalorder %s173, %s176
      %p182 = scmp.eq.s32.totalorder %s21, 0
      %p183 = por %p181, %p182
      %p184 = scmp.ne.s32.totalorder %s173, %s176
      %p185 = scmp.eq.s32.totalorder %s26, 1
      %p186 = por %p184, %p185
      %p187 = scmp.ne.s32.totalorder %s176, %s177
      %p188 = scmp.eq.s32.totalorder %s26, 0
      %p189 = por %p187, %p188
      %p190 = scmp.ne.s32.totalorder %s176, %s177
      %p191 = scmp.eq.s32.totalorder %s27, 1
      %p192 = por %p190, %p191
      %p194 = scmp.ne.s32.totalorder %s177, %s193
      %p195 = scmp.eq.s32.totalorder %s27, 0
      %p196 = por %p194, %p195
      %s198 = sadd.s32 %s197, 1
      %p201 = scmp.eq.s32.totalorder %s21, 1
      %p202 = scmp.ne.s32.totalorder %s197, %s199
      %p203 = scmp.eq.s32.totalorder %s21, 0
      %p204 = por %p202, %p203
      %p205 = scmp.ne.s32.totalorder %s197, %s199
      %p206 = scmp.eq.s32.totalorder %s26, 1
      %p207 = por %p205, %p206
      %p208 = scmp.ne.s32.totalorder %s199, %s200
      %p209 = scmp.eq.s32.totalorder %s26, 0
      %p210 = por %p208, %p209
      %p211 = scmp.ne.s32.totalorder %s199, %s200
      %p212 = scmp.eq.s32.totalorder %s27, 1
      %p213 = por %p211, %p212
      %p215 = scmp.ne.s32.totalorder %s200, %s214
      %p216 = scmp.eq.s32.totalorder %s27, 0
      %p217 = por %p215, %p216
      %s218 = ssub.s32 %s28, %s40
      %p219 = scmp.eq.s32.totalorder %s218, 0
      %s221 = sadd.s32 %s220, 1
      %s222 = scalar_select %p219, %s220, %s221
      %p225 = pneg %p219
      %p226 = scmp.eq.s32.totalorder %s21, 1
      %p227 = por %p225, %p226
      %p228 = scmp.ne.s32.totalorder %s220, %s223
      %p229 = scmp.eq.s32.totalorder %s21, 0
      %p230 = por %p228, %p229
      %p231 = scmp.ne.s32.totalorder %s220, %s223
      %p232 = scmp.eq.s32.totalorder %s26, 1
      %p233 = por %p231, %p232
      %p234 = scmp.ne.s32.totalorder %s223, %s224
      %p235 = scmp.eq.s32.totalorder %s26, 0
      %p236 = por %p234, %p235
      %p237 = scmp.ne.s32.totalorder %s223, %s224
      %p238 = scmp.eq.s32.totalorder %s27, 1
      %p239 = por %p237, %p238
      %p241 = scmp.ne.s32.totalorder %s224, %s240
      %p242 = scmp.eq.s32.totalorder %s27, 0
      %p243 = por %p241, %p242
      %p244 = scmp.le.s32.totalorder 1, %s21
      %p245 = scmp.lt.s32.totalorder %s21, 3
      %p246 = pnand %p244, %p245
      %p247 = pneg %p246
      // Predicated region
      $region9: #{expert_forward.1} parent=5 // pred_check
        _
      $region10: #{expert_forward.1} parent=5 // pred_check_branch
        %249 = sbr.rel (%p246) target = $region12
      $region11: #{expert_forward.1} parent=5 // pred_region
        %s250 = ssub.s32 %s21, 1
        // Predicated region
        $region13: #{expert_forward.1} parent=11 // pred_check
          %p251 = pneg %p59
        $region14: #{expert_forward.1} parent=11 // pred_check_branch
          %253 = sbr.rel (%p251) target = $region16
        $region15: #{expert_forward.1} parent=11 // pred_region
          %s254 = smul.u32 32, %s30
          %s256 = ssub.s32 4096, 4096
          %257 = vsyncadd [#allocation3], %s256
          %s258 = smul.addr %s254, 128
          %s259 = scalar_lea.hbm %s0, %s258
          %s260 = sshll.u32 [#allocation2], 4
          %s261 = int_to_ptr.vmem [resolvable:$true] %s260
          %266 = dma.hbm_to_vmem [thread:$0]  %s259, 4096, %s261, [#allocation3], 128, 128, 8
        $region16: #{expert_forward.1} parent=11 // pred_fallthru
          _
        // Predicated region
        $region17: #{expert_forward.1} parent=11 // pred_check
          %p267 = pneg %p210
        $region18: #{expert_forward.1} parent=11 // pred_check_branch
          %269 = sbr.rel (%p267) target = $region20
        $region19: #{expert_forward.1} parent=11 // pred_region
          _
        $region20: #{expert_forward.1} parent=11 // pred_fallthru
          _
      $region12: #{expert_forward.1} parent=5 // pred_fallthru
        _
      %p270 = scmp.lt.s32.totalorder %s21, 2
      // Predicated region
      $region21: #{expert_forward.1} parent=5 // pred_check
        %p271 = pneg %p270
      $region22: #{expert_forward.1} parent=5 // pred_check_branch
        %273 = sbr.rel (%p271) target = $region24
      $region23: #{expert_forward.1} parent=5 // pred_region
        // Predicated region
        $region25: #{expert_forward.1} parent=23 // pred_check
          %p274 = pneg %p79
        $region26: #{expert_forward.1} parent=23 // pred_check_branch
          %276 = sbr.rel (%p274) target = $region28
        $region27: #{expert_forward.1} parent=23 // pred_region
          %s277 = sand.u32 %s21, 1
          %s278 = scalar_lea.sflag [#allocation6], %s277
          %s279 = sand.u32 %s69, 1
          %s280 = smul.addr %s279, 256
          %s281 = scalar_lea.vmem [#allocation5], %s280
          %s282 = smul.u32 2, %s29
          %s284 = ssub.s32 4096, 4096
          %285 = vsyncadd %s278, %s284
          %s286 = smul.addr %s282, 128
          %s287 = scalar_lea.hbm %s1, %s286
          %s288 = sshll.u32 %s281, 4
          %s289 = int_to_ptr.vmem [resolvable:$true] %s288
          %294 = dma.hbm_to_vmem [thread:$0]  %s287, 4096, %s289, %s278, 512, 256, 16
        $region28: #{expert_forward.1} parent=23 // pred_fallthru
          _
        // Predicated region
        $region29: #{expert_forward.1} parent=23 // pred_check
          %p295 = pneg %p105
        $region30: #{expert_forward.1} parent=23 // pred_check_branch
          %297 = sbr.rel (%p295) target = $region32
        $region31: #{expert_forward.1} parent=23 // pred_region
          %s298 = smul.u32 2, %s29
          %p299 = scmp.lt.s32.totalorder %s298, 3
          %s300 = scalar_select %p299, %s298, 3
          %s301 = scalar_lea.vmem %s2, %s300
          %s302 = smul.u32 2, %s29
        $region32: #{expert_forward.1} parent=23 // pred_fallthru
          _
        // Predicated region
        $region33: #{expert_forward.1} parent=23 // pred_check
          %p303 = pneg %p131
        $region34: #{expert_forward.1} parent=23 // pred_check_branch
          %305 = sbr.rel (%p303) target = $region36
        $region35: #{expert_forward.1} parent=23 // pred_region
          %s306 = sand.u32 %s21, 1
          %s307 = scalar_lea.sflag [#allocation6], %s306
          %s308 = sand.u32 %s121, 1
          %s309 = smul.addr %s308, 256
          %s310 = scalar_lea.vmem [#allocation7], %s309
          %s311 = smul.u32 2, %s29
          %s313 = ssub.s32 4096, 4096
          %314 = vsyncadd %s307, %s313
          %s315 = smul.addr %s311, 128
          %s316 = scalar_lea.hbm %s3, %s315
          %s317 = sshll.u32 %s310, 4
          %s318 = int_to_ptr.vmem [resolvable:$true] %s317
          %323 = dma.hbm_to_vmem [thread:$0]  %s316, 4096, %s318, %s307, 512, 256, 16
        $region36: #{expert_forward.1} parent=23 // pred_fallthru
          _
        // Predicated region
        $region37: #{expert_forward.1} parent=23 // pred_check
          %p324 = pneg %p157
        $region38: #{expert_forward.1} parent=23 // pred_check_branch
          %326 = sbr.rel (%p324) target = $region40
        $region39: #{expert_forward.1} parent=23 // pred_region
          %s327 = smul.u32 2, %s29
          %p328 = scmp.lt.s32.totalorder %s327, 3
          %s329 = scalar_select %p328, %s327, 3
          %s330 = scalar_lea.vmem %s4, %s329
          %s331 = smul.u32 2, %s29
        $region40: #{expert_forward.1} parent=23 // pred_fallthru
          _
        // Predicated region
        $region41: #{expert_forward.1} parent=23 // pred_check
          %p332 = pneg %p183
        $region42: #{expert_forward.1} parent=23 // pred_check_branch
          %334 = sbr.rel (%p332) target = $region44
        $region43: #{expert_forward.1} parent=23 // pred_region
          %s335 = sand.u32 %s173, 1
          %s336 = scalar_lea.sflag [#allocation9], %s335
          %s337 = sand.u32 %s173, 1
          %s338 = smul.addr %s337, 256
          %s339 = scalar_lea.vmem [#allocation8], %s338
          %s340 = smul.u32 32, %s29
          %s342 = ssub.s32 4096, 4096
          %343 = vsyncadd %s336, %s342
          %s344 = smul.addr %s340, 128
          %s345 = scalar_lea.hbm %s5, %s344
          %s346 = sshll.u32 %s339, 4
          %s347 = int_to_ptr.vmem [resolvable:$true] %s346
          %352 = dma.hbm_to_vmem [thread:$0]  %s345, 4096, %s347, %s336, 128, 128, 8
        $region44: #{expert_forward.1} parent=23 // pred_fallthru
          _
      $region24: #{expert_forward.1} parent=5 // pred_fallthru
        _
      %p353 = scmp.le.s32.totalorder 1, %s21
      %p354 = scmp.lt.s32.totalorder %s21, 3
      %p355 = pnand %p353, %p354
      %p356 = pneg %p355
      // Predicated region
      $region45: #{expert_forward.1} parent=5 // pred_check
        _
      $region46: #{expert_forward.1} parent=5 // pred_check_branch
        %358 = sbr.rel (%p355) target = $region48
      $region47: #{expert_forward.1} parent=5 // pred_region
        %s359 = ssub.s32 %s21, 1
        // Predicated region
        $region49: #{expert_forward.1} parent=47 // pred_check
          %p360 = pneg %p59
        $region50: #{expert_forward.1} parent=47 // pred_check_branch
          %362 = sbr.rel (%p360) target = $region52
        $region51: #{expert_forward.1} parent=47 // pred_region
          %363 = dma.done [#allocation3], 4096
        $region52: #{expert_forward.1} parent=47 // pred_fallthru
          _
        %s364 = sand.u32 %s26, 1
        %s365 = scalar_lea.sflag [#allocation6], %s364
        %s366 = sand.u32 %s72, 1
        %s367 = smul.addr %s366, 256
        %s368 = scalar_lea.vmem [#allocation5], %s367
        // Predicated region
        $region53: #{expert_forward.1} parent=47 // pred_check
          %p369 = pneg %p85
        $region54: #{expert_forward.1} parent=47 // pred_check_branch
          %371 = sbr.rel (%p369) target = $region56
        $region55: #{expert_forward.1} parent=47 // pred_region
          %372 = dma.done %s365, 4096
        $region56: #{expert_forward.1} parent=47 // pred_fallthru
          _
        %s373 = sand.u32 %s26, 1
        %s374 = scalar_lea.sflag [#allocation6], %s373
        %s375 = sand.u32 %s124, 1
        %s376 = smul.addr %s375, 256
        %s377 = scalar_lea.vmem [#allocation7], %s376
        // Predicated region
        $region57: #{expert_forward.1} parent=47 // pred_check
          %p378 = pneg %p137
        $region58: #{expert_forward.1} parent=47 // pred_check_branch
          %380 = sbr.rel (%p378) target = $region60
        $region59: #{expert_forward.1} parent=47 // pred_region
          %381 = dma.done %s374, 4096
        $region60: #{expert_forward.1} parent=47 // pred_fallthru
          _
        %s382 = sand.u32 %s176, 1
        %s383 = scalar_lea.sflag [#allocation9], %s382
        %s384 = sand.u32 %s176, 1
        %s385 = smul.addr %s384, 256
        %s386 = scalar_lea.vmem [#allocation8], %s385
        // Predicated region
        $region61: #{expert_forward.1} parent=47 // pred_check
          %p387 = pneg %p189
        $region62: #{expert_forward.1} parent=47 // pred_check_branch
          %389 = sbr.rel (%p387) target = $region64
        $region63: #{expert_forward.1} parent=47 // pred_region
          %390 = dma.done %s383, 4096
        $region64: #{expert_forward.1} parent=47 // pred_fallthru
          _
        %p391 = pneg %p59
        %p392 = pneg %p56
        %s393 = sand.u32 %s26, 1
        %s394 = scalar_lea.sflag [#allocation6], %s393
        %s395 = sand.u32 %s72, 1
        %s396 = smul.addr %s395, 256
        %s397 = scalar_lea.vmem [#allocation5], %s396
        %p398 = pneg %p85
        %p399 = pneg %p82
        %s400 = smul.u32 2, %s31
        %p401 = scmp.lt.s32.totalorder %s400, 3
        %s402 = scalar_select %p401, %s400, 3
        %s403 = scalar_lea.vmem %s2, %s402
        %p404 = pneg %p111
        %p405 = pneg %p108
        %s406 = sand.u32 %s26, 1
        %s407 = scalar_lea.sflag [#allocation6], %s406
        %s408 = sand.u32 %s124, 1
        %s409 = smul.addr %s408, 256
        %s410 = scalar_lea.vmem [#allocation7], %s409
        %p411 = pneg %p137
        %p412 = pneg %p134
        %s413 = smul.u32 2, %s31
        %p414 = scmp.lt.s32.totalorder %s413, 3
        %s415 = scalar_select %p414, %s413, 3
        %s416 = scalar_lea.vmem %s4, %s415
        %p417 = pneg %p163
        %p418 = pneg %p160
        %s419 = sand.u32 %s176, 1
        %s420 = scalar_lea.sflag [#allocation9], %s419
        %s421 = sand.u32 %s176, 1
        %s422 = smul.addr %s421, 256
        %s423 = scalar_lea.vmem [#allocation8], %s422
        %p424 = pneg %p189
        %p425 = pneg %p186
        %p426 = pneg %p210
        %p427 = pneg %p207
        %p428 = pneg %p236
        %p429 = pneg %p233
        %s430 = smul.u32 32, %s30
        %s431 = smul.u32 2, %s31
        %s432 = smul.u32 2, %s31
        %p433 = scmp.lt.s32.totalorder %s432, 3
        %s434 = scalar_select %p433, %s432, 3
        %s435 = scalar_lea.vmem %s2, %s434
        %s436 = smul.u32 2, %s31
        %s437 = smul.u32 2, %s31
        %s438 = smul.u32 2, %s31
        %p439 = scmp.lt.s32.totalorder %s438, 3
        %s440 = scalar_select %p439, %s438, 3
        %s441 = scalar_lea.vmem %s4, %s440
        %s442 = smul.u32 2, %s31
        %s443 = smul.u32 32, %s31
        %s444 = smul.u32 32, %s30
        %p445 = scmp.eq.s32.totalorder %s31, 0
        // Predicated region
        $region65: #{expert_forward.1} parent=47 // pred_check
          %p446 = pneg %p445
        $region66: #{expert_forward.1} parent=47 // pred_check_branch
          %448 = sbr.rel (%p446) target = $region68
        $region67: #{expert_forward.1} parent=47 // pred_region
          %v449 = vld [vmem:[%s6] sm:$0x1]
          %v451 = vlaneseq
          %v452 = vshrl.u32 %v451, 7
          %v453 = vsub.s32 0, %v452
          %v454 = vrot.slane %v449, %v453
          %456 = vst [vmem:[#allocation10] sm:$0xff] %v454
          %457 = vst [vmem:[#allocation10 + $0x8] sm:$0xff] %v454
          %458 = vst [vmem:[#allocation10 + $0x10] sm:$0xff] %v454
          %459 = vst [vmem:[#allocation10 + $0x18] sm:$0xff] %v454
          %460 = vst [vmem:[#allocation10 + $0x20] sm:$0xff] %v454
          %461 = vst [vmem:[#allocation10 + $0x28] sm:$0xff] %v454
          %462 = vst [vmem:[#allocation10 + $0x30] sm:$0xff] %v454
          %463 = vst [vmem:[#allocation10 + $0x38] sm:$0xff] %v454
          %464 = vst [vmem:[#allocation10 + $0x40] sm:$0xff] %v454
          %465 = vst [vmem:[#allocation10 + $0x48] sm:$0xff] %v454
          %466 = vst [vmem:[#allocation10 + $0x50] sm:$0xff] %v454
          %467 = vst [vmem:[#allocation10 + $0x58] sm:$0xff] %v454
          %468 = vst [vmem:[#allocation10 + $0x60] sm:$0xff] %v454
          %469 = vst [vmem:[#allocation10 + $0x68] sm:$0xff] %v454
          %470 = vst [vmem:[#allocation10 + $0x70] sm:$0xff] %v454
          %471 = vst [vmem:[#allocation10 + $0x78] sm:$0xff] %v454
          %472 = vst [vmem:[#allocation10 + $0x80] sm:$0xff] %v454
          %473 = vst [vmem:[#allocation10 + $0x88] sm:$0xff] %v454
          %474 = vst [vmem:[#allocation10 + $0x90] sm:$0xff] %v454
          %475 = vst [vmem:[#allocation10 + $0x98] sm:$0xff] %v454
          %476 = vst [vmem:[#allocation10 + $0xa0] sm:$0xff] %v454
          %477 = vst [vmem:[#allocation10 + $0xa8] sm:$0xff] %v454
          %478 = vst [vmem:[#allocation10 + $0xb0] sm:$0xff] %v454
          %479 = vst [vmem:[#allocation10 + $0xb8] sm:$0xff] %v454
          %480 = vst [vmem:[#allocation10 + $0xc0] sm:$0xff] %v454
          %481 = vst [vmem:[#allocation10 + $0xc8] sm:$0xff] %v454
          %482 = vst [vmem:[#allocation10 + $0xd0] sm:$0xff] %v454
          %483 = vst [vmem:[#allocation10 + $0xd8] sm:$0xff] %v454
          %484 = vst [vmem:[#allocation10 + $0xe0] sm:$0xff] %v454
          %485 = vst [vmem:[#allocation10 + $0xe8] sm:$0xff] %v454
          %486 = vst [vmem:[#allocation10 + $0xf0] sm:$0xff] %v454
          %487 = vst [vmem:[#allocation10 + $0xf8] sm:$0xff] %v454
        $region68: #{expert_forward.1} parent=47 // pred_fallthru
          _
        %v488 = vld [vmem:[#allocation2] sm:$0xff]
        %v489 = vld [vmem:[#allocation2 + $0x8] sm:$0xff]
        %v490 = vld [vmem:[#allocation2 + $0x10] sm:$0xff]
        %v491 = vld [vmem:[#allocation2 + $0x18] sm:$0xff]
        %v492 = vld [vmem:[#allocation2 + $0x20] sm:$0xff]
        %v493 = vld [vmem:[#allocation2 + $0x28] sm:$0xff]
        %v494 = vld [vmem:[#allocation2 + $0x30] sm:$0xff]
        %v495 = vld [vmem:[#allocation2 + $0x38] sm:$0xff]
        %v496 = vld [vmem:[#allocation2 + $0x40] sm:$0xff]
        %v497 = vld [vmem:[#allocation2 + $0x48] sm:$0xff]
        %v498 = vld [vmem:[#allocation2 + $0x50] sm:$0xff]
        %v499 = vld [vmem:[#allocation2 + $0x58] sm:$0xff]
        %v500 = vld [vmem:[#allocation2 + $0x60] sm:$0xff]
        %v501 = vld [vmem:[#allocation2 + $0x68] sm:$0xff]
        %v502 = vld [vmem:[#allocation2 + $0x70] sm:$0xff]
        %v503 = vld [vmem:[#allocation2 + $0x78] sm:$0xff]
        %v504 = vld [vmem:[#allocation2 + $0x80] sm:$0xff]
        %v505 = vld [vmem:[#allocation2 + $0x88] sm:$0xff]
        %v506 = vld [vmem:[#allocation2 + $0x90] sm:$0xff]
        %v507 = vld [vmem:[#allocation2 + $0x98] sm:$0xff]
        %v508 = vld [vmem:[#allocation2 + $0xa0] sm:$0xff]
        %v509 = vld [vmem:[#allocation2 + $0xa8] sm:$0xff]
        %v510 = vld [vmem:[#allocation2 + $0xb0] sm:$0xff]
        %v511 = vld [vmem:[#allocation2 + $0xb8] sm:$0xff]
        %v512 = vld [vmem:[#allocation2 + $0xc0] sm:$0xff]
        %v513 = vld [vmem:[#allocation2 + $0xc8] sm:$0xff]
        %v514 = vld [vmem:[#allocation2 + $0xd0] sm:$0xff]
        %v515 = vld [vmem:[#allocation2 + $0xd8] sm:$0xff]
        %v516 = vld [vmem:[#allocation2 + $0xe0] sm:$0xff]
        %v517 = vld [vmem:[#allocation2 + $0xe8] sm:$0xff]
        %v518 = vld [vmem:[#allocation2 + $0xf0] sm:$0xff]
        %v519 = vld [vmem:[#allocation2 + $0xf8] sm:$0xff]
        %v520 = vld [vmem:[%s368] sm:$0xff]
        %v521 = vld [vmem:[%s368 + $0x8] sm:$0xff]
        %v522 = vld [vmem:[%s368 + $0x10] sm:$0xff]
        %v523 = vld [vmem:[%s368 + $0x18] sm:$0xff]
        %v524 = vld [vmem:[%s368 + $0x20] sm:$0xff]
        %v525 = vld [vmem:[%s368 + $0x28] sm:$0xff]
        %v526 = vld [vmem:[%s368 + $0x30] sm:$0xff]
        %v527 = vld [vmem:[%s368 + $0x38] sm:$0xff]
        %v528 = vld [vmem:[%s368 + $0x40] sm:$0xff]
        %v529 = vld [vmem:[%s368 + $0x48] sm:$0xff]
        %v530 = vld [vmem:[%s368 + $0x50] sm:$0xff]
        %v531 = vld [vmem:[%s368 + $0x58] sm:$0xff]
        %v532 = vld [vmem:[%s368 + $0x60] sm:$0xff]
        %v533 = vld [vmem:[%s368 + $0x68] sm:$0xff]
        %v534 = vld [vmem:[%s368 + $0x70] sm:$0xff]
        %v535 = vld [vmem:[%s368 + $0x78] sm:$0xff]
        %v536 = vld [vmem:[%s368 + $0x80] sm:$0xff]
        %v537 = vld [vmem:[%s368 + $0x88] sm:$0xff]
        %v538 = vld [vmem:[%s368 + $0x90] sm:$0xff]
        %v539 = vld [vmem:[%s368 + $0x98] sm:$0xff]
        %v540 = vld [vmem:[%s368 + $0xa0] sm:$0xff]
        %v541 = vld [vmem:[%s368 + $0xa8] sm:$0xff]
        %v542 = vld [vmem:[%s368 + $0xb0] sm:$0xff]
        %v543 = vld [vmem:[%s368 + $0xb8] sm:$0xff]
        %v544 = vld [vmem:[%s368 + $0xc0] sm:$0xff]
        %v545 = vld [vmem:[%s368 + $0xc8] sm:$0xff]
        %v546 = vld [vmem:[%s368 + $0xd0] sm:$0xff]
        %v547 = vld [vmem:[%s368 + $0xd8] sm:$0xff]
        %v548 = vld [vmem:[%s368 + $0xe0] sm:$0xff]
        %v549 = vld [vmem:[%s368 + $0xe8] sm:$0xff]
        %v550 = vld [vmem:[%s368 + $0xf0] sm:$0xff]
        %v551 = vld [vmem:[%s368 + $0xf8] sm:$0xff]
        %v552 = vld [vmem:[%s435] sm:$0x3]
        %v554 = vlaneseq
        %v555 = vshrl.u32 %v554, 7
        %v556 = vsub.s32 0, %v555
        %v557 = vrot.slane %v552, %v556
        %v558 = vlaneseq
        %v559 = vshrl.u32 %v558, 7
        %v560 = vsub.s32 1, %v559
        %v561 = vrot.slane %v552, %v560
        %564 = vmatprep.subr.mxu0 %v521
        %565 = vmatpush1.msra.mxu0 %v520
        %566 = vmatprep.subr.mxu0 %v523
        %567 = vmatpush1.msra.mxu0 %v522
        %568 = vmatprep.subr.mxu0 %v525
        %569 = vmatpush1.msra.mxu0 %v524
        %570 = vmatprep.subr.mxu0 %v527
        %571 = vmatpush1.msra.mxu0 %v526
        %572 = vmatprep.subr.mxu0 %v529
        %573 = vmatpush1.msra.mxu0 %v528
        %574 = vmatprep.subr.mxu0 %v531
        %575 = vmatpush1.msra.mxu0 %v530
        %576 = vmatprep.subr.mxu0 %v533
        %577 = vmatpush1.msra.mxu0 %v532
        %578 = vmatprep.subr.mxu0 %v535
        %579 = vmatpush1.msra.mxu0 %v534
        %580 = vmatprep.subr.mxu0 %v537
        %581 = vmatpush1.msra.mxu0 %v536
        %582 = vmatprep.subr.mxu0 %v539
        %583 = vmatpush1.msra.mxu0 %v538
        %584 = vmatprep.subr.mxu0 %v541
        %585 = vmatpush1.msra.mxu0 %v540
        %586 = vmatprep.subr.mxu0 %v543
        %587 = vmatpush1.msra.mxu0 %v542
        %588 = vmatprep.subr.mxu0 %v545
        %589 = vmatpush1.msra.mxu0 %v544
        %590 = vmatprep.subr.mxu0 %v547
        %591 = vmatpush1.msra.mxu0 %v546
        %592 = vmatprep.subr.mxu0 %v549
        %593 = vmatpush1.msra.mxu0 %v548
        %594 = vmatprep.subr.mxu0 %v551
        %595 = vmatpush1.msra.mxu0 %v550
        %596 = vmatprep.subr.mxu0 0.0
        %597 = vmatpush1.msra.mxu0 0.0
        %598 = vmatprep.subr.mxu0 0.0
        %599 = vmatpush1.msra.mxu0 0.0
        %600 = vmatprep.subr.mxu0 0.0
        %601 = vmatpush1.msra.mxu0 0.0
        %602 = vmatprep.subr.mxu0 0.0
        %603 = vmatpush1.msra.mxu0 0.0
        %604 = vmatprep.subr.mxu0 0.0
        %605 = vmatpush1.msra.mxu0 0.0
        %606 = vmatprep.subr.mxu0 0.0
        %607 = vmatpush1.msra.mxu0 0.0
        %608 = vmatprep.subr.mxu0 0.0
        %609 = vmatpush1.msra.mxu0 0.0
        %610 = vmatprep.subr.mxu0 0.0
        %611 = vmatpush1.msra.mxu0 0.0
        %612 = vmatprep.subr.mxu0 0.0
        %613 = vmatpush1.msra.mxu0 0.0
        %614 = vmatprep.subr.mxu0 0.0
        %615 = vmatpush1.msra.mxu0 0.0
        %616 = vmatprep.subr.mxu0 0.0
        %617 = vmatpush1.msra.mxu0 0.0
        %618 = vmatprep.subr.mxu0 0.0
        %619 = vmatpush1.msra.mxu0 0.0
        %620 = vmatprep.subr.mxu0 0.0
        %621 = vmatpush1.msra.mxu0 0.0
        %622 = vmatprep.subr.mxu0 0.0
        %623 = vmatpush1.msra.mxu0 0.0
        %624 = vmatprep.subr.mxu0 0.0
        %625 = vmatpush1.msra.mxu0 0.0
        %626 = vmatprep.subr.mxu0 0.0
        %627 = vmatpush1.msra.mxu0 0.0
        %628 = vmatprep.mubr.f32.mxu0 0.0
        %629 = vmatmul.mubr.f32.gmra.mrb[0].mxu0 %v488
        %v630 = vpop.f32.mrb[0].mxu0
        %v631 = vadd.f32 %v557, %v630
        %v632 = vpop.f32.mrb[0].mxu0
        %v633 = vadd.f32 %v561, %v632
        %634 = vmatprep.mubr.f32.mxu0 0.0
        %635 = vmatmul.mubr.f32.gmra.mrb[0].mxu0 %v489
        %v636 = vpop.f32.mrb[0].mxu0
        %v637 = vadd.f32 %v557, %v636
        %v638 = vpop.f32.mrb[0].mxu0
        %v639 = vadd.f32 %v561, %v638
        %640 = vmatprep.mubr.f32.mxu0 0.0
        %641 = vmatmul.mubr.f32.gmra.mrb[0].mxu0 %v490
        %v642 = vpop.f32.mrb[0].mxu0
        %v643 = vadd.f32 %v557, %v642
        %v644 = vpop.f32.mrb[0].mxu0
        %v645 = vadd.f32 %v561, %v644
        %646 = vmatprep.mubr.f32.mxu0 0.0
        %647 = vmatmul.mubr.f32.gmra.mrb[0].mxu0 %v491
        %v648 = vpop.f32.mrb[0].mxu0
        %v649 = vadd.f32 %v557, %v648
        %v650 = vpop.f32.mrb[0].mxu0
        %v651 = vadd.f32 %v561, %v650
        %652 = vmatprep.mubr.f32.mxu0 0.0
        %653 = vmatmul.mubr.f32.gmra.mrb[0].mxu0 %v492
        %v654 = vpop.f32.mrb[0].mxu0
        %v655 = vadd.f32 %v557, %v654
        %v656 = vpop.f32.mrb[0].mxu0
        %v657 = vadd.f32 %v561, %v656
        %658 = vmatprep.mubr.f32.mxu0 0.0
        %659 = vmatmul.mubr.f32.gmra.mrb[0].mxu0 %v493
        %v660 = vpop.f32.mrb[0].mxu0
        %v661 = vadd.f32 %v557, %v660
        %v662 = vpop.f32.mrb[0].mxu0
        %v663 = vadd.f32 %v561, %v662
        %664 = vmatprep.mubr.f32.mxu0 0.0
        %665 = vmatmul.mubr.f32.gmra.mrb[0].mxu0 %v494
        %v666 = vpop.f32.mrb[0].mxu0
        %v667 = vadd.f32 %v557, %v666
        %v668 = vpop.f32.mrb[0].mxu0
        %v669 = vadd.f32 %v561, %v668
        %670 = vmatprep.mubr.f32.mxu0 0.0
        %671 = vmatmul.mubr.f32.gmra.mrb[0].mxu0 %v495
        %v672 = vpop.f32.mrb[0].mxu0
        %v673 = vadd.f32 %v557, %v672
        %v674 = vpop.f32.mrb[0].mxu0
        %v675 = vadd.f32 %v561, %v674
        %676 = vmatprep.mubr.f32.mxu0 0.0
        %677 = vmatmul.mubr.f32.gmra.mrb[0].mxu0 %v496
        %v678 = vpop.f32.mrb[0].mxu0
        %v679 = vadd.f32 %v557, %v678
        %v680 = vpop.f32.mrb[0].mxu0
        %v681 = vadd.f32 %v561, %v680
        %682 = vmatprep.mubr.f32.mxu0 0.0
        %683 = vmatmul.mubr.f32.gmra.mrb[0].mxu0 %v497
        %v684 = vpop.f32.mrb[0].mxu0
        %v685 = vadd.f32 %v557, %v684
        %v686 = vpop.f32.mrb[0].mxu0
        %v687 = vadd.f32 %v561, %v686
        %688 = vmatprep.mubr.f32.mxu0 0.0
        %689 = vmatmul.mubr.f32.gmra.mrb[0].mxu0 %v498
        %v690 = vpop.f32.mrb[0].mxu0
        %v691 = vadd.f32 %v557, %v690
        %v692 = vpop.f32.mrb[0].mxu0
        %v693 = vadd.f32 %v561, %v692
        %694 = vmatprep.mubr.f32.mxu0 0.0
        %695 = vmatmul.mubr.f32.gmra.mrb[0].mxu0 %v499
        %v696 = vpop.f32.mrb[0].mxu0
        %v697 = vadd.f32 %v557, %v696
        %v698 = vpop.f32.mrb[0].mxu0
        %v699 = vadd.f32 %v561, %v698
        %700 = vmatprep.mubr.f32.mxu0 0.0
        %701 = vmatmul.mubr.f32.gmra.mrb[0].mxu0 %v500
        %v702 = vpop.f32.mrb[0].mxu0
        %v703 = vadd.f32 %v557, %v702
        %v704 = vpop.f32.mrb[0].mxu0
        %v705 = vadd.f32 %v561, %v704
        %706 = vmatprep.mubr.f32.mxu0 0.0
        %707 = vmatmul.mubr.f32.gmra.mrb[0].mxu0 %v501
        %v708 = vpop.f32.mrb[0].mxu0
        %v709 = vadd.f32 %v557, %v708
        %v710 = vpop.f32.mrb[0].mxu0
        %v711 = vadd.f32 %v561, %v710
        %712 = vmatprep.mubr.f32.mxu0 0.0
        %713 = vmatmul.mubr.f32.gmra.mrb[0].mxu0 %v502
        %v714 = vpop.f32.mrb[0].mxu0
        %v715 = vadd.f32 %v557, %v714
        %v716 = vpop.f32.mrb[0].mxu0
        %v717 = vadd.f32 %v561, %v716
        %718 = vmatprep.mubr.f32.mxu0 0.0
        %719 = vmatmul.mubr.f32.gmra.mrb[0].mxu0 %v503
        %v720 = vpop.f32.mrb[0].mxu0
        %v721 = vadd.f32 %v557, %v720
        %v722 = vpop.f32.mrb[0].mxu0
        %v723 = vadd.f32 %v561, %v722
        %724 = vmatprep.mubr.f32.mxu0 0.0
        %725 = vmatmul.mubr.f32.gmra.mrb[0].mxu0 %v504
        %v726 = vpop.f32.mrb[0].mxu0
        %v727 = vadd.f32 %v557, %v726
        %v728 = vpop.f32.mrb[0].mxu0
        %v729 = vadd.f32 %v561, %v728
        %730 = vmatprep.mubr.f32.mxu0 0.0
        %731 = vmatmul.mubr.f32.gmra.mrb[0].mxu0 %v505
        %v732 = vpop.f32.mrb[0].mxu0
        %v733 = vadd.f32 %v557, %v732
        %v734 = vpop.f32.mrb[0].mxu0
        %v735 = vadd.f32 %v561, %v734
        %736 = vmatprep.mubr.f32.mxu0 0.0
        %737 = vmatmul.mubr.f32.gmra.mrb[0].mxu0 %v506
        %v738 = vpop.f32.mrb[0].mxu0
        %v739 = vadd.f32 %v557, %v738
        %v740 = vpop.f32.mrb[0].mxu0
        %v741 = vadd.f32 %v561, %v740
        %742 = vmatprep.mubr.f32.mxu0 0.0
        %743 = vmatmul.mubr.f32.gmra.mrb[0].mxu0 %v507
        %v744 = vpop.f32.mrb[0].mxu0
        %v745 = vadd.f32 %v557, %v744
        %v746 = vpop.f32.mrb[0].mxu0
        %v747 = vadd.f32 %v561, %v746
        %748 = vmatprep.mubr.f32.mxu0 0.0
        %749 = vmatmul.mubr.f32.gmra.mrb[0].mxu0 %v508
        %v750 = vpop.f32.mrb[0].mxu0
        %v751 = vadd.f32 %v557, %v750
        %v752 = vpop.f32.mrb[0].mxu0
        %v753 = vadd.f32 %v561, %v752
        %754 = vmatprep.mubr.f32.mxu0 0.0
        %755 = vmatmul.mubr.f32.gmra.mrb[0].mxu0 %v509
        %v756 = vpop.f32.mrb[0].mxu0
        %v757 = vadd.f32 %v557, %v756
        %v758 = vpop.f32.mrb[0].mxu0
        %v759 = vadd.f32 %v561, %v758
        %760 = vmatprep.mubr.f32.mxu0 0.0
        %761 = vmatmul.mubr.f32.gmra.mrb[0].mxu0 %v510
        %v762 = vpop.f32.mrb[0].mxu0
        %v763 = vadd.f32 %v557, %v762
        %v764 = vpop.f32.mrb[0].mxu0
        %v765 = vadd.f32 %v561, %v764
        %766 = vmatprep.mubr.f32.mxu0 0.0
        %767 = vmatmul.mubr.f32.gmra.mrb[0].mxu0 %v511
        %v768 = vpop.f32.mrb[0].mxu0
        %v769 = vadd.f32 %v557, %v768
        %v770 = vpop.f32.mrb[0].mxu0
        %v771 = vadd.f32 %v561, %v770
        %772 = vmatprep.mubr.f32.mxu0 0.0
        %773 = vmatmul.mubr.f32.gmra.mrb[0].mxu0 %v512
        %v774 = vpop.f32.mrb[0].mxu0
        %v775 = vadd.f32 %v557, %v774
        %v776 = vpop.f32.mrb[0].mxu0
        %v777 = vadd.f32 %v561, %v776
        %778 = vmatprep.mubr.f32.mxu0 0.0
        %779 = vmatmul.mubr.f32.gmra.mrb[0].mxu0 %v513
        %v780 = vpop.f32.mrb[0].mxu0
        %v781 = vadd.f32 %v557, %v780
        %v782 = vpop.f32.mrb[0].mxu0
        %v783 = vadd.f32 %v561, %v782
        %784 = vmatprep.mubr.f32.mxu0 0.0
        %785 = vmatmul.mubr.f32.gmra.mrb[0].mxu0 %v514
        %v786 = vpop.f32.mrb[0].mxu0
        %v787 = vadd.f32 %v557, %v786
        %v788 = vpop.f32.mrb[0].mxu0
        %v789 = vadd.f32 %v561, %v788
        %790 = vmatprep.mubr.f32.mxu0 0.0
        %791 = vmatmul.mubr.f32.gmra.mrb[0].mxu0 %v515
        %v792 = vpop.f32.mrb[0].mxu0
        %v793 = vadd.f32 %v557, %v792
        %v794 = vpop.f32.mrb[0].mxu0
        %v795 = vadd.f32 %v561, %v794
        %796 = vmatprep.mubr.f32.mxu0 0.0
        %797 = vmatmul.mubr.f32.gmra.mrb[0].mxu0 %v516
        %v798 = vpop.f32.mrb[0].mxu0
        %v799 = vadd.f32 %v557, %v798
        %v800 = vpop.f32.mrb[0].mxu0
        %v801 = vadd.f32 %v561, %v800
        %802 = vmatprep.mubr.f32.mxu0 0.0
        %803 = vmatmul.mubr.f32.gmra.mrb[0].mxu0 %v517
        %v804 = vpop.f32.mrb[0].mxu0
        %v805 = vadd.f32 %v557, %v804
        %v806 = vpop.f32.mrb[0].mxu0
        %v807 = vadd.f32 %v561, %v806
        %808 = vmatprep.mubr.f32.mxu0 0.0
        %809 = vmatmul.mubr.f32.gmra.mrb[0].mxu0 %v518
        %v810 = vpop.f32.mrb[0].mxu0
        %v811 = vadd.f32 %v557, %v810
        %v812 = vpop.f32.mrb[0].mxu0
        %v813 = vadd.f32 %v561, %v812
        %814 = vmatprep.mubr.f32.mxu0 0.0
        %815 = vmatmul.mubr.f32.gmra.mrb[0].mxu0 %v519
        %v816 = vpop.f32.mrb[0].mxu0
        %v817 = vadd.f32 %v557, %v816
        %v818 = vpop.f32.mrb[0].mxu0
        %v819 = vadd.f32 %v561, %v818
        %820 = vdwg.mxu0
        %v821 = vld [vmem:[%s377] sm:$0xff]
        %v822 = vld [vmem:[%s377 + $0x8] sm:$0xff]
        %v823 = vld [vmem:[%s377 + $0x10] sm:$0xff]
        %v824 = vld [vmem:[%s377 + $0x18] sm:$0xff]
        %v825 = vld [vmem:[%s377 + $0x20] sm:$0xff]
        %v826 = vld [vmem:[%s377 + $0x28] sm:$0xff]
        %v827 = vld [vmem:[%s377 + $0x30] sm:$0xff]
        %v828 = vld [vmem:[%s377 + $0x38] sm:$0xff]
        %v829 = vld [vmem:[%s377 + $0x40] sm:$0xff]
        %v830 = vld [vmem:[%s377 + $0x48] sm:$0xff]
        %v831 = vld [vmem:[%s377 + $0x50] sm:$0xff]
        %v832 = vld [vmem:[%s377 + $0x58] sm:$0xff]
        %v833 = vld [vmem:[%s377 + $0x60] sm:$0xff]
        %v834 = vld [vmem:[%s377 + $0x68] sm:$0xff]
        %v835 = vld [vmem:[%s377 + $0x70] sm:$0xff]
        %v836 = vld [vmem:[%s377 + $0x78] sm:$0xff]
        %v837 = vld [vmem:[%s377 + $0x80] sm:$0xff]
        %v838 = vld [vmem:[%s377 + $0x88] sm:$0xff]
        %v839 = vld [vmem:[%s377 + $0x90] sm:$0xff]
        %v840 = vld [vmem:[%s377 + $0x98] sm:$0xff]
        %v841 = vld [vmem:[%s377 + $0xa0] sm:$0xff]
        %v842 = vld [vmem:[%s377 + $0xa8] sm:$0xff]
        %v843 = vld [vmem:[%s377 + $0xb0] sm:$0xff]
        %v844 = vld [vmem:[%s377 + $0xb8] sm:$0xff]
        %v845 = vld [vmem:[%s377 + $0xc0] sm:$0xff]
        %v846 = vld [vmem:[%s377 + $0xc8] sm:$0xff]
        %v847 = vld [vmem:[%s377 + $0xd0] sm:$0xff]
        %v848 = vld [vmem:[%s377 + $0xd8] sm:$0xff]
        %v849 = vld [vmem:[%s377 + $0xe0] sm:$0xff]
        %v850 = vld [vmem:[%s377 + $0xe8] sm:$0xff]
        %v851 = vld [vmem:[%s377 + $0xf0] sm:$0xff]
        %v852 = vld [vmem:[%s377 + $0xf8] sm:$0xff]
        %v853 = vld [vmem:[%s441] sm:$0x3]
        %v855 = vlaneseq
        %v856 = vshrl.u32 %v855, 7
        %v857 = vsub.s32 0, %v856
        %v858 = vrot.slane %v853, %v857
        %v859 = vlaneseq
        %v860 = vshrl.u32 %v859, 7
        %v861 = vsub.s32 1, %v860
        %v862 = vrot.slane %v853, %v861
        %865 = vmatprep.subr.mxu0 %v822
        %866 = vmatpush1.msra.mxu0 %v821
        %867 = vmatprep.subr.mxu0 %v824
        %868 = vmatpush1.msra.mxu0 %v823
        %869 = vmatprep.subr.mxu0 %v826
        %870 = vmatpush1.msra.mxu0 %v825
        %871 = vmatprep.subr.mxu0 %v828
        %872 = vmatpush1.msra.mxu0 %v827
        %873 = vmatprep.subr.mxu0 %v830
        %874 = vmatpush1.msra.mxu0 %v829
        %875 = vmatprep.subr.mxu0 %v832
        %876 = vmatpush1.msra.mxu0 %v831
        %877 = vmatprep.subr.mxu0 %v834
        %878 = vmatpush1.msra.mxu0 %v833
        %879 = vmatprep.subr.mxu0 %v836
        %880 = vmatpush1.msra.mxu0 %v835
        %881 = vmatprep.subr.mxu0 %v838
        %882 = vmatpush1.msra.mxu0 %v837
        %883 = vmatprep.subr.mxu0 %v840
        %884 = vmatpush1.msra.mxu0 %v839
        %885 = vmatprep.subr.mxu0 %v842
        %886 = vmatpush1.msra.mxu0 %v841
        %887 = vmatprep.subr.mxu0 %v844
        %888 = vmatpush1.msra.mxu0 %v843
        %889 = vmatprep.subr.mxu0 %v846
        %890 = vmatpush1.msra.mxu0 %v845
        %891 = vmatprep.subr.mxu0 %v848
        %892 = vmatpush1.msra.mxu0 %v847
        %893 = vmatprep.subr.mxu0 %v850
        %894 = vmatpush1.msra.mxu0 %v849
        %895 = vmatprep.subr.mxu0 %v852
        %896 = vmatpush1.msra.mxu0 %v851
        %897 = vmatprep.subr.mxu0 0.0
        %898 = vmatpush1.msra.mxu0 0.0
        %899 = vmatprep.subr.mxu0 0.0
        %900 = vmatpush1.msra.mxu0 0.0
        %901 = vmatprep.subr.mxu0 0.0
        %902 = vmatpush1.msra.mxu0 0.0
        %903 = vmatprep.subr.mxu0 0.0
        %904 = vmatpush1.msra.mxu0 0.0
        %905 = vmatprep.subr.mxu0 0.0
        %906 = vmatpush1.msra.mxu0 0.0
        %907 = vmatprep.subr.mxu0 0.0
        %908 = vmatpush1.msra.mxu0 0.0
        %909 = vmatprep.subr.mxu0 0.0
        %910 = vmatpush1.msra.mxu0 0.0
        %911 = vmatprep.subr.mxu0 0.0
        %912 = vmatpush1.msra.mxu0 0.0
        %913 = vmatprep.subr.mxu0 0.0
        %914 = vmatpush1.msra.mxu0 0.0
        %915 = vmatprep.subr.mxu0 0.0
        %916 = vmatpush1.msra.mxu0 0.0
        %917 = vmatprep.subr.mxu0 0.0
        %918 = vmatpush1.msra.mxu0 0.0
        %919 = vmatprep.subr.mxu0 0.0
        %920 = vmatpush1.msra.mxu0 0.0
        %921 = vmatprep.subr.mxu0 0.0
        %922 = vmatpush1.msra.mxu0 0.0
        %923 = vmatprep.subr.mxu0 0.0
        %924 = vmatpush1.msra.mxu0 0.0
        %925 = vmatprep.subr.mxu0 0.0
        %926 = vmatpush1.msra.mxu0 0.0
        %927 = vmatprep.subr.mxu0 0.0
        %928 = vmatpush1.msra.mxu0 0.0
        %929 = vmatprep.mubr.f32.mxu0 0.0
        %930 = vmatmul.mubr.f32.gmra.mrb[0].mxu0 %v488
        %v931 = vpop.f32.mrb[0].mxu0
        %v932 = vadd.f32 %v858, %v931
        %v933 = vpop.f32.mrb[0].mxu0
        %v934 = vadd.f32 %v862, %v933
        %935 = vmatprep.mubr.f32.mxu0 0.0
        %936 = vmatmul.mubr.f32.gmra.mrb[0].mxu0 %v489
        %v937 = vpop.f32.mrb[0].mxu0
        %v938 = vadd.f32 %v858, %v937
        %v939 = vpop.f32.mrb[0].mxu0
        %v940 = vadd.f32 %v862, %v939
        %941 = vmatprep.mubr.f32.mxu0 0.0
        %942 = vmatmul.mubr.f32.gmra.mrb[0].mxu0 %v490
        %v943 = vpop.f32.mrb[0].mxu0
        %v944 = vadd.f32 %v858, %v943
        %v945 = vpop.f32.mrb[0].mxu0
        %v946 = vadd.f32 %v862, %v945
        %947 = vmatprep.mubr.f32.mxu0 0.0
        %948 = vmatmul.mubr.f32.gmra.mrb[0].mxu0 %v491
        %v949 = vpop.f32.mrb[0].mxu0
        %v950 = vadd.f32 %v858, %v949
        %v951 = vpop.f32.mrb[0].mxu0
        %v952 = vadd.f32 %v862, %v951
        %953 = vmatprep.mubr.f32.mxu0 0.0
        %954 = vmatmul.mubr.f32.gmra.mrb[0].mxu0 %v492
        %v955 = vpop.f32.mrb[0].mxu0
        %v956 = vadd.f32 %v858, %v955
        %v957 = vpop.f32.mrb[0].mxu0
        %v958 = vadd.f32 %v862, %v957
        %959 = vmatprep.mubr.f32.mxu0 0.0
        %960 = vmatmul.mubr.f32.gmra.mrb[0].mxu0 %v493
        %v961 = vpop.f32.mrb[0].mxu0
        %v962 = vadd.f32 %v858, %v961
        %v963 = vpop.f32.mrb[0].mxu0
        %v964 = vadd.f32 %v862, %v963
        %965 = vmatprep.mubr.f32.mxu0 0.0
        %966 = vmatmul.mubr.f32.gmra.mrb[0].mxu0 %v494
        %v967 = vpop.f32.mrb[0].mxu0
        %v968 = vadd.f32 %v858, %v967
        %v969 = vpop.f32.mrb[0].mxu0
        %v970 = vadd.f32 %v862, %v969
        %971 = vmatprep.mubr.f32.mxu0 0.0
        %972 = vmatmul.mubr.f32.gmra.mrb[0].mxu0 %v495
        %v973 = vpop.f32.mrb[0].mxu0
        %v974 = vadd.f32 %v858, %v973
        %v975 = vpop.f32.mrb[0].mxu0
        %v976 = vadd.f32 %v862, %v975
        %977 = vmatprep.mubr.f32.mxu0 0.0
        %978 = vmatmul.mubr.f32.gmra.mrb[0].mxu0 %v496
        %v979 = vpop.f32.mrb[0].mxu0
        %v980 = vadd.f32 %v858, %v979
        %v981 = vpop.f32.mrb[0].mxu0
        %v982 = vadd.f32 %v862, %v981
        %983 = vmatprep.mubr.f32.mxu0 0.0
        %984 = vmatmul.mubr.f32.gmra.mrb[0].mxu0 %v497
        %v985 = vpop.f32.mrb[0].mxu0
        %v986 = vadd.f32 %v858, %v985
        %v987 = vpop.f32.mrb[0].mxu0
        %v988 = vadd.f32 %v862, %v987
        %989 = vmatprep.mubr.f32.mxu0 0.0
        %990 = vmatmul.mubr.f32.gmra.mrb[0].mxu0 %v498
        %v991 = vpop.f32.mrb[0].mxu0
        %v992 = vadd.f32 %v858, %v991
        %v993 = vpop.f32.mrb[0].mxu0
        %v994 = vadd.f32 %v862, %v993
        %995 = vmatprep.mubr.f32.mxu0 0.0
        %996 = vmatmul.mubr.f32.gmra.mrb[0].mxu0 %v499
        %v997 = vpop.f32.mrb[0].mxu0
        %v998 = vadd.f32 %v858, %v997
        %v999 = vpop.f32.mrb[0].mxu0
        %v1000 = vadd.f32 %v862, %v999
        %1001 = vmatprep.mubr.f32.mxu0 0.0
        %1002 = vmatmul.mubr.f32.gmra.mrb[0].mxu0 %v500
        %v1003 = vpop.f32.mrb[0].mxu0
        %v1004 = vadd.f32 %v858, %v1003
        %v1005 = vpop.f32.mrb[0].mxu0
        %v1006 = vadd.f32 %v862, %v1005
        %1007 = vmatprep.mubr.f32.mxu0 0.0
        %1008 = vmatmul.mubr.f32.gmra.mrb[0].mxu0 %v501
        %v1009 = vpop.f32.mrb[0].mxu0
        %v1010 = vadd.f32 %v858, %v1009
        %v1011 = vpop.f32.mrb[0].mxu0
        %v1012 = vadd.f32 %v862, %v1011
        %1013 = vmatprep.mubr.f32.mxu0 0.0
        %1014 = vmatmul.mubr.f32.gmra.mrb[0].mxu0 %v502
        %v1015 = vpop.f32.mrb[0].mxu0
        %v1016 = vadd.f32 %v858, %v1015
        %v1017 = vpop.f32.mrb[0].mxu0
        %v1018 = vadd.f32 %v862, %v1017
        %1019 = vmatprep.mubr.f32.mxu0 0.0
        %1020 = vmatmul.mubr.f32.gmra.mrb[0].mxu0 %v503
        %v1021 = vpop.f32.mrb[0].mxu0
        %v1022 = vadd.f32 %v858, %v1021
        %v1023 = vpop.f32.mrb[0].mxu0
        %v1024 = vadd.f32 %v862, %v1023
        %1025 = vmatprep.mubr.f32.mxu0 0.0
        %1026 = vmatmul.mubr.f32.gmra.mrb[0].mxu0 %v504
        %v1027 = vpop.f32.mrb[0].mxu0
        %v1028 = vadd.f32 %v858, %v1027
        %v1029 = vpop.f32.mrb[0].mxu0
        %v1030 = vadd.f32 %v862, %v1029
        %1031 = vmatprep.mubr.f32.mxu0 0.0
        %1032 = vmatmul.mubr.f32.gmra.mrb[0].mxu0 %v505
        %v1033 = vpop.f32.mrb[0].mxu0
        %v1034 = vadd.f32 %v858, %v1033
        %v1035 = vpop.f32.mrb[0].mxu0
        %v1036 = vadd.f32 %v862, %v1035
        %1037 = vmatprep.mubr.f32.mxu0 0.0
        %1038 = vmatmul.mubr.f32.gmra.mrb[0].mxu0 %v506
        %v1039 = vpop.f32.mrb[0].mxu0
        %v1040 = vadd.f32 %v858, %v1039
        %v1041 = vpop.f32.mrb[0].mxu0
        %v1042 = vadd.f32 %v862, %v1041
        %1043 = vmatprep.mubr.f32.mxu0 0.0
        %1044 = vmatmul.mubr.f32.gmra.mrb[0].mxu0 %v507
        %v1045 = vpop.f32.mrb[0].mxu0
        %v1046 = vadd.f32 %v858, %v1045
        %v1047 = vpop.f32.mrb[0].mxu0
        %v1048 = vadd.f32 %v862, %v1047
        %1049 = vmatprep.mubr.f32.mxu0 0.0
        %1050 = vmatmul.mubr.f32.gmra.mrb[0].mxu0 %v508
        %v1051 = vpop.f32.mrb[0].mxu0
        %v1052 = vadd.f32 %v858, %v1051
        %v1053 = vpop.f32.mrb[0].mxu0
        %v1054 = vadd.f32 %v862, %v1053
        %1055 = vmatprep.mubr.f32.mxu0 0.0
        %1056 = vmatmul.mubr.f32.gmra.mrb[0].mxu0 %v509
        %v1057 = vpop.f32.mrb[0].mxu0
        %v1058 = vadd.f32 %v858, %v1057
        %v1059 = vpop.f32.mrb[0].mxu0
        %v1060 = vadd.f32 %v862, %v1059
        %1061 = vmatprep.mubr.f32.mxu0 0.0
        %1062 = vmatmul.mubr.f32.gmra.mrb[0].mxu0 %v510
        %v1063 = vpop.f32.mrb[0].mxu0
        %v1064 = vadd.f32 %v858, %v1063
        %v1065 = vpop.f32.mrb[0].mxu0
        %v1066 = vadd.f32 %v862, %v1065
        %1067 = vmatprep.mubr.f32.mxu0 0.0
        %1068 = vmatmul.mubr.f32.gmra.mrb[0].mxu0 %v511
        %v1069 = vpop.f32.mrb[0].mxu0
        %v1070 = vadd.f32 %v858, %v1069
        %v1071 = vpop.f32.mrb[0].mxu0
        %v1072 = vadd.f32 %v862, %v1071
        %1073 = vmatprep.mubr.f32.mxu0 0.0
        %1074 = vmatmul.mubr.f32.gmra.mrb[0].mxu0 %v512
        %v1075 = vpop.f32.mrb[0].mxu0
        %v1076 = vadd.f32 %v858, %v1075
        %v1077 = vpop.f32.mrb[0].mxu0
        %v1078 = vadd.f32 %v862, %v1077
        %1079 = vmatprep.mubr.f32.mxu0 0.0
        %1080 = vmatmul.mubr.f32.gmra.mrb[0].mxu0 %v513
        %v1081 = vpop.f32.mrb[0].mxu0
        %v1082 = vadd.f32 %v858, %v1081
        %v1083 = vpop.f32.mrb[0].mxu0
        %v1084 = vadd.f32 %v862, %v1083
        %1085 = vmatprep.mubr.f32.mxu0 0.0
        %1086 = vmatmul.mubr.f32.gmra.mrb[0].mxu0 %v514
        %v1087 = vpop.f32.mrb[0].mxu0
        %v1088 = vadd.f32 %v858, %v1087
        %v1089 = vpop.f32.mrb[0].mxu0
        %v1090 = vadd.f32 %v862, %v1089
        %1091 = vmatprep.mubr.f32.mxu0 0.0
        %1092 = vmatmul.mubr.f32.gmra.mrb[0].mxu0 %v515
        %v1093 = vpop.f32.mrb[0].mxu0
        %v1094 = vadd.f32 %v858, %v1093
        %v1095 = vpop.f32.mrb[0].mxu0
        %v1096 = vadd.f32 %v862, %v1095
        %1097 = vmatprep.mubr.f32.mxu0 0.0
        %1098 = vmatmul.mubr.f32.gmra.mrb[0].mxu0 %v516
        %v1099 = vpop.f32.mrb[0].mxu0
        %v1100 = vadd.f32 %v858, %v1099
        %v1101 = vpop.f32.mrb[0].mxu0
        %v1102 = vadd.f32 %v862, %v1101
        %1103 = vmatprep.mubr.f32.mxu0 0.0
        %1104 = vmatmul.mubr.f32.gmra.mrb[0].mxu0 %v517
        %v1105 = vpop.f32.mrb[0].mxu0
        %v1106 = vadd.f32 %v858, %v1105
        %v1107 = vpop.f32.mrb[0].mxu0
        %v1108 = vadd.f32 %v862, %v1107
        %1109 = vmatprep.mubr.f32.mxu0 0.0
        %1110 = vmatmul.mubr.f32.gmra.mrb[0].mxu0 %v518
        %v1111 = vpop.f32.mrb[0].mxu0
        %v1112 = vadd.f32 %v858, %v1111
        %v1113 = vpop.f32.mrb[0].mxu0
        %v1114 = vadd.f32 %v862, %v1113
        %1115 = vmatprep.mubr.f32.mxu0 0.0
        %1116 = vmatmul.mubr.f32.gmra.mrb[0].mxu0 %v519
        %v1117 = vpop.f32.mrb[0].mxu0
        %v1118 = vadd.f32 %v858, %v1117
        %v1119 = vpop.f32.mrb[0].mxu0
        %v1120 = vadd.f32 %v862, %v1119
        %1121 = vdwg.mxu0
        %v1122 = vxor.u32 %v631, 2147483648
        %v1123 = vxor.u32 %v633, 2147483648
        %v1124 = vxor.u32 %v637, 2147483648
        %v1125 = vxor.u32 %v639, 2147483648
        %v1126 = vxor.u32 %v643, 2147483648
        %v1127 = vxor.u32 %v645, 2147483648
        %v1128 = vxor.u32 %v649, 2147483648
        %v1129 = vxor.u32 %v651, 2147483648
        %v1130 = vxor.u32 %v655, 2147483648
        %v1131 = vxor.u32 %v657, 2147483648
        %v1132 = vxor.u32 %v661, 2147483648
        %v1133 = vxor.u32 %v663, 2147483648
        %v1134 = vxor.u32 %v667, 2147483648
        %v1135 = vxor.u32 %v669, 2147483648
        %v1136 = vxor.u32 %v673, 2147483648
        %v1137 = vxor.u32 %v675, 2147483648
        %v1138 = vxor.u32 %v679, 2147483648
        %v1139 = vxor.u32 %v681, 2147483648
        %v1140 = vxor.u32 %v685, 2147483648
        %v1141 = vxor.u32 %v687, 2147483648
        %v1142 = vxor.u32 %v691, 2147483648
        %v1143 = vxor.u32 %v693, 2147483648
        %v1144 = vxor.u32 %v697, 2147483648
        %v1145 = vxor.u32 %v699, 2147483648
        %v1146 = vxor.u32 %v703, 2147483648
        %v1147 = vxor.u32 %v705, 2147483648
        %v1148 = vxor.u32 %v709, 2147483648
        %v1149 = vxor.u32 %v711, 2147483648
        %v1150 = vxor.u32 %v715, 2147483648
        %v1151 = vxor.u32 %v717, 2147483648
        %v1152 = vxor.u32 %v721, 2147483648
        %v1153 = vxor.u32 %v723, 2147483648
        %v1154 = vxor.u32 %v727, 2147483648
        %v1155 = vxor.u32 %v729, 2147483648
        %v1156 = vxor.u32 %v733, 2147483648
        %v1157 = vxor.u32 %v735, 2147483648
        %v1158 = vxor.u32 %v739, 2147483648
        %v1159 = vxor.u32 %v741, 2147483648
        %v1160 = vxor.u32 %v745, 2147483648
        %v1161 = vxor.u32 %v747, 2147483648
        %v1162 = vxor.u32 %v751, 2147483648
        %v1163 = vxor.u32 %v753, 2147483648
        %v1164 = vxor.u32 %v757, 2147483648
        %v1165 = vxor.u32 %v759, 2147483648
        %v1166 = vxor.u32 %v763, 2147483648
        %v1167 = vxor.u32 %v765, 2147483648
        %v1168 = vxor.u32 %v769, 2147483648
        %v1169 = vxor.u32 %v771, 2147483648
        %v1170 = vxor.u32 %v775, 2147483648
        %v1171 = vxor.u32 %v777, 2147483648
        %v1172 = vxor.u32 %v781, 2147483648
        %v1173 = vxor.u32 %v783, 2147483648
        %v1174 = vxor.u32 %v787, 2147483648
        %v1175 = vxor.u32 %v789, 2147483648
        %v1176 = vxor.u32 %v793, 2147483648
        %v1177 = vxor.u32 %v795, 2147483648
        %v1178 = vxor.u32 %v799, 2147483648
        %v1179 = vxor.u32 %v801, 2147483648
        %v1180 = vxor.u32 %v805, 2147483648
        %v1181 = vxor.u32 %v807, 2147483648
        %v1182 = vxor.u32 %v811, 2147483648
        %v1183 = vxor.u32 %v813, 2147483648
        %v1184 = vxor.u32 %v817, 2147483648
        %v1185 = vxor.u32 %v819, 2147483648
        %v1186 = vmul.f32 %v1122, 1.442695
        %v1187 = vpow.pop %v1186
        %v1188 = vmul.f32 %v1123, 1.442695
        %v1189 = vpow.pop %v1188
        %v1190 = vmul.f32 %v1124, 1.442695
        %v1191 = vpow.pop %v1190
        %v1192 = vmul.f32 %v1125, 1.442695
        %v1193 = vpow.pop %v1192
        %v1194 = vmul.f32 %v1126, 1.442695
        %v1195 = vpow.pop %v1194
        %v1196 = vmul.f32 %v1127, 1.442695
        %v1197 = vpow.pop %v1196
        %v1198 = vmul.f32 %v1128, 1.442695
        %v1199 = vpow.pop %v1198
        %v1200 = vmul.f32 %v1129, 1.442695
        %v1201 = vpow.pop %v1200
        %v1202 = vmul.f32 %v1130, 1.442695
        %v1203 = vpow.pop %v1202
        %v1204 = vmul.f32 %v1131, 1.442695
        %v1205 = vpow.pop %v1204
        %v1206 = vmul.f32 %v1132, 1.442695
        %v1207 = vpow.pop %v1206
        %v1208 = vmul.f32 %v1133, 1.442695
        %v1209 = vpow.pop %v1208
        %v1210 = vmul.f32 %v1134, 1.442695
        %v1211 = vpow.pop %v1210
        %v1212 = vmul.f32 %v1135, 1.442695
        %v1213 = vpow.pop %v1212
        %v1214 = vmul.f32 %v1136, 1.442695
        %v1215 = vpow.pop %v1214
        %v1216 = vmul.f32 %v1137, 1.442695
        %v1217 = vpow.pop %v1216
        %v1218 = vmul.f32 %v1138, 1.442695
        %v1219 = vpow.pop %v1218
        %v1220 = vmul.f32 %v1139, 1.442695
        %v1221 = vpow.pop %v1220
        %v1222 = vmul.f32 %v1140, 1.442695
        %v1223 = vpow.pop %v1222
        %v1224 = vmul.f32 %v1141, 1.442695
        %v1225 = vpow.pop %v1224
        %v1226 = vmul.f32 %v1142, 1.442695
        %v1227 = vpow.pop %v1226
        %v1228 = vmul.f32 %v1143, 1.442695
        %v1229 = vpow.pop %v1228
        %v1230 = vmul.f32 %v1144, 1.442695
        %v1231 = vpow.pop %v1230
        %v1232 = vmul.f32 %v1145, 1.442695
        %v1233 = vpow.pop %v1232
        %v1234 = vmul.f32 %v1146, 1.442695
        %v1235 = vpow.pop %v1234
        %v1236 = vmul.f32 %v1147, 1.442695
        %v1237 = vpow.pop %v1236
        %v1238 = vmul.f32 %v1148, 1.442695
        %v1239 = vpow.pop %v1238
        %v1240 = vmul.f32 %v1149, 1.442695
        %v1241 = vpow.pop %v1240
        %v1242 = vmul.f32 %v1150, 1.442695
        %v1243 = vpow.pop %v1242
        %v1244 = vmul.f32 %v1151, 1.442695
        %v1245 = vpow.pop %v1244
        %v1246 = vmul.f32 %v1152, 1.442695
        %v1247 = vpow.pop %v1246
        %v1248 = vmul.f32 %v1153, 1.442695
        %v1249 = vpow.pop %v1248
        %v1250 = vmul.f32 %v1154, 1.442695
        %v1251 = vpow.pop %v1250
        %v1252 = vmul.f32 %v1155, 1.442695
        %v1253 = vpow.pop %v1252
        %v1254 = vmul.f32 %v1156, 1.442695
        %v1255 = vpow.pop %v1254
        %v1256 = vmul.f32 %v1157, 1.442695
        %v1257 = vpow.pop %v1256
        %v1258 = vmul.f32 %v1158, 1.442695
        %v1259 = vpow.pop %v1258
        %v1260 = vmul.f32 %v1159, 1.442695
        %v1261 = vpow.pop %v1260
        %v1262 = vmul.f32 %v1160, 1.442695
        %v1263 = vpow.pop %v1262
        %v1264 = vmul.f32 %v1161, 1.442695
        %v1265 = vpow.pop %v1264
        %v1266 = vmul.f32 %v1162, 1.442695
        %v1267 = vpow.pop %v1266
        %v1268 = vmul.f32 %v1163, 1.442695
        %v1269 = vpow.pop %v1268
        %v1270 = vmul.f32 %v1164, 1.442695
        %v1271 = vpow.pop %v1270
        %v1272 = vmul.f32 %v1165, 1.442695
        %v1273 = vpow.pop %v1272
        %v1274 = vmul.f32 %v1166, 1.442695
        %v1275 = vpow.pop %v1274
        %v1276 = vmul.f32 %v1167, 1.442695
        %v1277 = vpow.pop %v1276
        %v1278 = vmul.f32 %v1168, 1.442695
        %v1279 = vpow.pop %v1278
        %v1280 = vmul.f32 %v1169, 1.442695
        %v1281 = vpow.pop %v1280
        %v1282 = vmul.f32 %v1170, 1.442695
        %v1283 = vpow.pop %v1282
        %v1284 = vmul.f32 %v1171, 1.442695
        %v1285 = vpow.pop %v1284
        %v1286 = vmul.f32 %v1172, 1.442695
        %v1287 = vpow.pop %v1286
        %v1288 = vmul.f32 %v1173, 1.442695
        %v1289 = vpow.pop %v1288
        %v1290 = vmul.f32 %v1174, 1.442695
        %v1291 = vpow.pop %v1290
        %v1292 = vmul.f32 %v1175, 1.442695
        %v1293 = vpow.pop %v1292
        %v1294 = vmul.f32 %v1176, 1.442695
        %v1295 = vpow.pop %v1294
        %v1296 = vmul.f32 %v1177, 1.442695
        %v1297 = vpow.pop %v1296
        %v1298 = vmul.f32 %v1178, 1.442695
        %v1299 = vpow.pop %v1298
        %v1300 = vmul.f32 %v1179, 1.442695
        %v1301 = vpow.pop %v1300
        %v1302 = vmul.f32 %v1180, 1.442695
        %v1303 = vpow.pop %v1302
        %v1304 = vmul.f32 %v1181, 1.442695
        %v1305 = vpow.pop %v1304
        %v1306 = vmul.f32 %v1182, 1.442695
        %v1307 = vpow.pop %v1306
        %v1308 = vmul.f32 %v1183, 1.442695
        %v1309 = vpow.pop %v1308
        %v1310 = vmul.f32 %v1184, 1.442695
        %v1311 = vpow.pop %v1310
        %v1312 = vmul.f32 %v1185, 1.442695
        %v1313 = vpow.pop %v1312
        %v1314 = vadd.f32 %v1187, 1.0
        %v1315 = vadd.f32 %v1189, 1.0
        %v1316 = vadd.f32 %v1191, 1.0
        %v1317 = vadd.f32 %v1193, 1.0
        %v1318 = vadd.f32 %v1195, 1.0
        %v1319 = vadd.f32 %v1197, 1.0
        %v1320 = vadd.f32 %v1199, 1.0
        %v1321 = vadd.f32 %v1201, 1.0
        %v1322 = vadd.f32 %v1203, 1.0
        %v1323 = vadd.f32 %v1205, 1.0
        %v1324 = vadd.f32 %v1207, 1.0
        %v1325 = vadd.f32 %v1209, 1.0
        %v1326 = vadd.f32 %v1211, 1.0
        %v1327 = vadd.f32 %v1213, 1.0
        %v1328 = vadd.f32 %v1215, 1.0
        %v1329 = vadd.f32 %v1217, 1.0
        %v1330 = vadd.f32 %v1219, 1.0
        %v1331 = vadd.f32 %v1221, 1.0
        %v1332 = vadd.f32 %v1223, 1.0
        %v1333 = vadd.f32 %v1225, 1.0
        %v1334 = vadd.f32 %v1227, 1.0
        %v1335 = vadd.f32 %v1229, 1.0
        %v1336 = vadd.f32 %v1231, 1.0
        %v1337 = vadd.f32 %v1233, 1.0
        %v1338 = vadd.f32 %v1235, 1.0
        %v1339 = vadd.f32 %v1237, 1.0
        %v1340 = vadd.f32 %v1239, 1.0
        %v1341 = vadd.f32 %v1241, 1.0
        %v1342 = vadd.f32 %v1243, 1.0
        %v1343 = vadd.f32 %v1245, 1.0
        %v1344 = vadd.f32 %v1247, 1.0
        %v1345 = vadd.f32 %v1249, 1.0
        %v1346 = vadd.f32 %v1251, 1.0
        %v1347 = vadd.f32 %v1253, 1.0
        %v1348 = vadd.f32 %v1255, 1.0
        %v1349 = vadd.f32 %v1257, 1.0
        %v1350 = vadd.f32 %v1259, 1.0
        %v1351 = vadd.f32 %v1261, 1.0
        %v1352 = vadd.f32 %v1263, 1.0
        %v1353 = vadd.f32 %v1265, 1.0
        %v1354 = vadd.f32 %v1267, 1.0
        %v1355 = vadd.f32 %v1269, 1.0
        %v1356 = vadd.f32 %v1271, 1.0
        %v1357 = vadd.f32 %v1273, 1.0
        %v1358 = vadd.f32 %v1275, 1.0
        %v1359 = vadd.f32 %v1277, 1.0
        %v1360 = vadd.f32 %v1279, 1.0
        %v1361 = vadd.f32 %v1281, 1.0
        %v1362 = vadd.f32 %v1283, 1.0
        %v1363 = vadd.f32 %v1285, 1.0
        %v1364 = vadd.f32 %v1287, 1.0
        %v1365 = vadd.f32 %v1289, 1.0
        %v1366 = vadd.f32 %v1291, 1.0
        %v1367 = vadd.f32 %v1293, 1.0
        %v1368 = vadd.f32 %v1295, 1.0
        %v1369 = vadd.f32 %v1297, 1.0
        %v1370 = vadd.f32 %v1299, 1.0
        %v1371 = vadd.f32 %v1301, 1.0
        %v1372 = vadd.f32 %v1303, 1.0
        %v1373 = vadd.f32 %v1305, 1.0
        %v1374 = vadd.f32 %v1307, 1.0
        %v1375 = vadd.f32 %v1309, 1.0
        %v1376 = vadd.f32 %v1311, 1.0
        %v1377 = vadd.f32 %v1313, 1.0
        %v1378 = vrcp.pop %v1314
        %v1379 = vmul.f32 1.0, %v1378
        %v1380 = vrcp.pop %v1315
        %v1381 = vmul.f32 1.0, %v1380
        %v1382 = vrcp.pop %v1316
        %v1383 = vmul.f32 1.0, %v1382
        %v1384 = vrcp.pop %v1317
        %v1385 = vmul.f32 1.0, %v1384
        %v1386 = vrcp.pop %v1318
        %v1387 = vmul.f32 1.0, %v1386
        %v1388 = vrcp.pop %v1319
        %v1389 = vmul.f32 1.0, %v1388
        %v1390 = vrcp.pop %v1320
        %v1391 = vmul.f32 1.0, %v1390
        %v1392 = vrcp.pop %v1321
        %v1393 = vmul.f32 1.0, %v1392
        %v1394 = vrcp.pop %v1322
        %v1395 = vmul.f32 1.0, %v1394
        %v1396 = vrcp.pop %v1323
        %v1397 = vmul.f32 1.0, %v1396
        %v1398 = vrcp.pop %v1324
        %v1399 = vmul.f32 1.0, %v1398
        %v1400 = vrcp.pop %v1325
        %v1401 = vmul.f32 1.0, %v1400
        %v1402 = vrcp.pop %v1326
        %v1403 = vmul.f32 1.0, %v1402
        %v1404 = vrcp.pop %v1327
        %v1405 = vmul.f32 1.0, %v1404
        %v1406 = vrcp.pop %v1328
        %v1407 = vmul.f32 1.0, %v1406
        %v1408 = vrcp.pop %v1329
        %v1409 = vmul.f32 1.0, %v1408
        %v1410 = vrcp.pop %v1330
        %v1411 = vmul.f32 1.0, %v1410
        %v1412 = vrcp.pop %v1331
        %v1413 = vmul.f32 1.0, %v1412
        %v1414 = vrcp.pop %v1332
        %v1415 = vmul.f32 1.0, %v1414
        %v1416 = vrcp.pop %v1333
        %v1417 = vmul.f32 1.0, %v1416
        %v1418 = vrcp.pop %v1334
        %v1419 = vmul.f32 1.0, %v1418
        %v1420 = vrcp.pop %v1335
        %v1421 = vmul.f32 1.0, %v1420
        %v1422 = vrcp.pop %v1336
        %v1423 = vmul.f32 1.0, %v1422
        %v1424 = vrcp.pop %v1337
        %v1425 = vmul.f32 1.0, %v1424
        %v1426 = vrcp.pop %v1338
        %v1427 = vmul.f32 1.0, %v1426
        %v1428 = vrcp.pop %v1339
        %v1429 = vmul.f32 1.0, %v1428
        %v1430 = vrcp.pop %v1340
        %v1431 = vmul.f32 1.0, %v1430
        %v1432 = vrcp.pop %v1341
        %v1433 = vmul.f32 1.0, %v1432
        %v1434 = vrcp.pop %v1342
        %v1435 = vmul.f32 1.0, %v1434
        %v1436 = vrcp.pop %v1343
        %v1437 = vmul.f32 1.0, %v1436
        %v1438 = vrcp.pop %v1344
        %v1439 = vmul.f32 1.0, %v1438
        %v1440 = vrcp.pop %v1345
        %v1441 = vmul.f32 1.0, %v1440
        %v1442 = vrcp.pop %v1346
        %v1443 = vmul.f32 1.0, %v1442
        %v1444 = vrcp.pop %v1347
        %v1445 = vmul.f32 1.0, %v1444
        %v1446 = vrcp.pop %v1348
        %v1447 = vmul.f32 1.0, %v1446
        %v1448 = vrcp.pop %v1349
        %v1449 = vmul.f32 1.0, %v1448
        %v1450 = vrcp.pop %v1350
        %v1451 = vmul.f32 1.0, %v1450
        %v1452 = vrcp.pop %v1351
        %v1453 = vmul.f32 1.0, %v1452
        %v1454 = vrcp.pop %v1352
        %v1455 = vmul.f32 1.0, %v1454
        %v1456 = vrcp.pop %v1353
        %v1457 = vmul.f32 1.0, %v1456
        %v1458 = vrcp.pop %v1354
        %v1459 = vmul.f32 1.0, %v1458
        %v1460 = vrcp.pop %v1355
        %v1461 = vmul.f32 1.0, %v1460
        %v1462 = vrcp.pop %v1356
        %v1463 = vmul.f32 1.0, %v1462
        %v1464 = vrcp.pop %v1357
        %v1465 = vmul.f32 1.0, %v1464
        %v1466 = vrcp.pop %v1358
        %v1467 = vmul.f32 1.0, %v1466
        %v1468 = vrcp.pop %v1359
        %v1469 = vmul.f32 1.0, %v1468
        %v1470 = vrcp.pop %v1360
        %v1471 = vmul.f32 1.0, %v1470
        %v1472 = vrcp.pop %v1361
        %v1473 = vmul.f32 1.0, %v1472
        %v1474 = vrcp.pop %v1362
        %v1475 = vmul.f32 1.0, %v1474
        %v1476 = vrcp.pop %v1363
        %v1477 = vmul.f32 1.0, %v1476
        %v1478 = vrcp.pop %v1364
        %v1479 = vmul.f32 1.0, %v1478
        %v1480 = vrcp.pop %v1365
        %v1481 = vmul.f32 1.0, %v1480
        %v1482 = vrcp.pop %v1366
        %v1483 = vmul.f32 1.0, %v1482
        %v1484 = vrcp.pop %v1367
        %v1485 = vmul.f32 1.0, %v1484
        %v1486 = vrcp.pop %v1368
        %v1487 = vmul.f32 1.0, %v1486
        %v1488 = vrcp.pop %v1369
        %v1489 = vmul.f32 1.0, %v1488
        %v1490 = vrcp.pop %v1370
        %v1491 = vmul.f32 1.0, %v1490
        %v1492 = vrcp.pop %v1371
        %v1493 = vmul.f32 1.0, %v1492
        %v1494 = vrcp.pop %v1372
        %v1495 = vmul.f32 1.0, %v1494
        %v1496 = vrcp.pop %v1373
        %v1497 = vmul.f32 1.0, %v1496
        %v1498 = vrcp.pop %v1374
        %v1499 = vmul.f32 1.0, %v1498
        %v1500 = vrcp.pop %v1375
        %v1501 = vmul.f32 1.0, %v1500
        %v1502 = vrcp.pop %v1376
        %v1503 = vmul.f32 1.0, %v1502
        %v1504 = vrcp.pop %v1377
        %v1505 = vmul.f32 1.0, %v1504
        %v1506 = vmul.f32 %v631, %v1379
        %v1507 = vmul.f32 %v633, %v1381
        %v1508 = vmul.f32 %v637, %v1383
        %v1509 = vmul.f32 %v639, %v1385
        %v1510 = vmul.f32 %v643, %v1387
        %v1511 = vmul.f32 %v645, %v1389
        %v1512 = vmul.f32 %v649, %v1391
        %v1513 = vmul.f32 %v651, %v1393
        %v1514 = vmul.f32 %v655, %v1395
        %v1515 = vmul.f32 %v657, %v1397
        %v1516 = vmul.f32 %v661, %v1399
        %v1517 = vmul.f32 %v663, %v1401
        %v1518 = vmul.f32 %v667, %v1403
        %v1519 = vmul.f32 %v669, %v1405
        %v1520 = vmul.f32 %v673, %v1407
        %v1521 = vmul.f32 %v675, %v1409
        %v1522 = vmul.f32 %v679, %v1411
        %v1523 = vmul.f32 %v681, %v1413
        %v1524 = vmul.f32 %v685, %v1415
        %v1525 = vmul.f32 %v687, %v1417
        %v1526 = vmul.f32 %v691, %v1419
        %v1527 = vmul.f32 %v693, %v1421
        %v1528 = vmul.f32 %v697, %v1423
        %v1529 = vmul.f32 %v699, %v1425
        %v1530 = vmul.f32 %v703, %v1427
        %v1531 = vmul.f32 %v705, %v1429
        %v1532 = vmul.f32 %v709, %v1431
        %v1533 = vmul.f32 %v711, %v1433
        %v1534 = vmul.f32 %v715, %v1435
        %v1535 = vmul.f32 %v717, %v1437
        %v1536 = vmul.f32 %v721, %v1439
        %v1537 = vmul.f32 %v723, %v1441
        %v1538 = vmul.f32 %v727, %v1443
        %v1539 = vmul.f32 %v729, %v1445
        %v1540 = vmul.f32 %v733, %v1447
        %v1541 = vmul.f32 %v735, %v1449
        %v1542 = vmul.f32 %v739, %v1451
        %v1543 = vmul.f32 %v741, %v1453
        %v1544 = vmul.f32 %v745, %v1455
        %v1545 = vmul.f32 %v747, %v1457
        %v1546 = vmul.f32 %v751, %v1459
        %v1547 = vmul.f32 %v753, %v1461
        %v1548 = vmul.f32 %v757, %v1463
        %v1549 = vmul.f32 %v759, %v1465
        %v1550 = vmul.f32 %v763, %v1467
        %v1551 = vmul.f32 %v765, %v1469
        %v1552 = vmul.f32 %v769, %v1471
        %v1553 = vmul.f32 %v771, %v1473
        %v1554 = vmul.f32 %v775, %v1475
        %v1555 = vmul.f32 %v777, %v1477
        %v1556 = vmul.f32 %v781, %v1479
        %v1557 = vmul.f32 %v783, %v1481
        %v1558 = vmul.f32 %v787, %v1483
        %v1559 = vmul.f32 %v789, %v1485
        %v1560 = vmul.f32 %v793, %v1487
        %v1561 = vmul.f32 %v795, %v1489
        %v1562 = vmul.f32 %v799, %v1491
        %v1563 = vmul.f32 %v801, %v1493
        %v1564 = vmul.f32 %v805, %v1495
        %v1565 = vmul.f32 %v807, %v1497
        %v1566 = vmul.f32 %v811, %v1499
        %v1567 = vmul.f32 %v813, %v1501
        %v1568 = vmul.f32 %v817, %v1503
        %v1569 = vmul.f32 %v819, %v1505
        %v1570 = vmul.f32 %v1506, %v932
        %v1571 = vmul.f32 %v1507, %v934
        %v1572 = vmul.f32 %v1508, %v938
        %v1573 = vmul.f32 %v1509, %v940
        %v1574 = vmul.f32 %v1510, %v944
        %v1575 = vmul.f32 %v1511, %v946
        %v1576 = vmul.f32 %v1512, %v950
        %v1577 = vmul.f32 %v1513, %v952
        %v1578 = vmul.f32 %v1514, %v956
        %v1579 = vmul.f32 %v1515, %v958
        %v1580 = vmul.f32 %v1516, %v962
        %v1581 = vmul.f32 %v1517, %v964
        %v1582 = vmul.f32 %v1518, %v968
        %v1583 = vmul.f32 %v1519, %v970
        %v1584 = vmul.f32 %v1520, %v974
        %v1585 = vmul.f32 %v1521, %v976
        %v1586 = vmul.f32 %v1522, %v980
        %v1587 = vmul.f32 %v1523, %v982
        %v1588 = vmul.f32 %v1524, %v986
        %v1589 = vmul.f32 %v1525, %v988
        %v1590 = vmul.f32 %v1526, %v992
        %v1591 = vmul.f32 %v1527, %v994
        %v1592 = vmul.f32 %v1528, %v998
        %v1593 = vmul.f32 %v1529, %v1000
        %v1594 = vmul.f32 %v1530, %v1004
        %v1595 = vmul.f32 %v1531, %v1006
        %v1596 = vmul.f32 %v1532, %v1010
        %v1597 = vmul.f32 %v1533, %v1012
        %v1598 = vmul.f32 %v1534, %v1016
        %v1599 = vmul.f32 %v1535, %v1018
        %v1600 = vmul.f32 %v1536, %v1022
        %v1601 = vmul.f32 %v1537, %v1024
        %v1602 = vmul.f32 %v1538, %v1028
        %v1603 = vmul.f32 %v1539, %v1030
        %v1604 = vmul.f32 %v1540, %v1034
        %v1605 = vmul.f32 %v1541, %v1036
        %v1606 = vmul.f32 %v1542, %v1040
        %v1607 = vmul.f32 %v1543, %v1042
        %v1608 = vmul.f32 %v1544, %v1046
        %v1609 = vmul.f32 %v1545, %v1048
        %v1610 = vmul.f32 %v1546, %v1052
        %v1611 = vmul.f32 %v1547, %v1054
        %v1612 = vmul.f32 %v1548, %v1058
        %v1613 = vmul.f32 %v1549, %v1060
        %v1614 = vmul.f32 %v1550, %v1064
        %v1615 = vmul.f32 %v1551, %v1066
        %v1616 = vmul.f32 %v1552, %v1070
        %v1617 = vmul.f32 %v1553, %v1072
        %v1618 = vmul.f32 %v1554, %v1076
        %v1619 = vmul.f32 %v1555, %v1078
        %v1620 = vmul.f32 %v1556, %v1082
        %v1621 = vmul.f32 %v1557, %v1084
        %v1622 = vmul.f32 %v1558, %v1088
        %v1623 = vmul.f32 %v1559, %v1090
        %v1624 = vmul.f32 %v1560, %v1094
        %v1625 = vmul.f32 %v1561, %v1096
        %v1626 = vmul.f32 %v1562, %v1100
        %v1627 = vmul.f32 %v1563, %v1102
        %v1628 = vmul.f32 %v1564, %v1106
        %v1629 = vmul.f32 %v1565, %v1108
        %v1630 = vmul.f32 %v1566, %v1112
        %v1631 = vmul.f32 %v1567, %v1114
        %v1632 = vmul.f32 %v1568, %v1118
        %v1633 = vmul.f32 %v1569, %v1120
        %v1634 = vld [vmem:[#allocation10] sm:$0xff]
        %v1635 = vld [vmem:[#allocation10 + $0x8] sm:$0xff]
        %v1636 = vld [vmem:[#allocation10 + $0x10] sm:$0xff]
        %v1637 = vld [vmem:[#allocation10 + $0x18] sm:$0xff]
        %v1638 = vld [vmem:[#allocation10 + $0x20] sm:$0xff]
        %v1639 = vld [vmem:[#allocation10 + $0x28] sm:$0xff]
        %v1640 = vld [vmem:[#allocation10 + $0x30] sm:$0xff]
        %v1641 = vld [vmem:[#allocation10 + $0x38] sm:$0xff]
        %v1642 = vld [vmem:[#allocation10 + $0x40] sm:$0xff]
        %v1643 = vld [vmem:[#allocation10 + $0x48] sm:$0xff]
        %v1644 = vld [vmem:[#allocation10 + $0x50] sm:$0xff]
        %v1645 = vld [vmem:[#allocation10 + $0x58] sm:$0xff]
        %v1646 = vld [vmem:[#allocation10 + $0x60] sm:$0xff]
        %v1647 = vld [vmem:[#allocation10 + $0x68] sm:$0xff]
        %v1648 = vld [vmem:[#allocation10 + $0x70] sm:$0xff]
        %v1649 = vld [vmem:[#allocation10 + $0x78] sm:$0xff]
        %v1650 = vld [vmem:[#allocation10 + $0x80] sm:$0xff]
        %v1651 = vld [vmem:[#allocation10 + $0x88] sm:$0xff]
        %v1652 = vld [vmem:[#allocation10 + $0x90] sm:$0xff]
        %v1653 = vld [vmem:[#allocation10 + $0x98] sm:$0xff]
        %v1654 = vld [vmem:[#allocation10 + $0xa0] sm:$0xff]
        %v1655 = vld [vmem:[#allocation10 + $0xa8] sm:$0xff]
        %v1656 = vld [vmem:[#allocation10 + $0xb0] sm:$0xff]
        %v1657 = vld [vmem:[#allocation10 + $0xb8] sm:$0xff]
        %v1658 = vld [vmem:[#allocation10 + $0xc0] sm:$0xff]
        %v1659 = vld [vmem:[#allocation10 + $0xc8] sm:$0xff]
        %v1660 = vld [vmem:[#allocation10 + $0xd0] sm:$0xff]
        %v1661 = vld [vmem:[#allocation10 + $0xd8] sm:$0xff]
        %v1662 = vld [vmem:[#allocation10 + $0xe0] sm:$0xff]
        %v1663 = vld [vmem:[#allocation10 + $0xe8] sm:$0xff]
        %v1664 = vld [vmem:[#allocation10 + $0xf0] sm:$0xff]
        %v1665 = vld [vmem:[#allocation10 + $0xf8] sm:$0xff]
        %v1666 = vld [vmem:[%s386] sm:$0xff]
        %v1667 = vld [vmem:[%s386 + $0x8] sm:$0xff]
        %v1668 = vld [vmem:[%s386 + $0x10] sm:$0xff]
        %v1669 = vld [vmem:[%s386 + $0x18] sm:$0xff]
        %v1670 = vld [vmem:[%s386 + $0x20] sm:$0xff]
        %v1671 = vld [vmem:[%s386 + $0x28] sm:$0xff]
        %v1672 = vld [vmem:[%s386 + $0x30] sm:$0xff]
        %v1673 = vld [vmem:[%s386 + $0x38] sm:$0xff]
        %v1674 = vld [vmem:[%s386 + $0x40] sm:$0xff]
        %v1675 = vld [vmem:[%s386 + $0x48] sm:$0xff]
        %v1676 = vld [vmem:[%s386 + $0x50] sm:$0xff]
        %v1677 = vld [vmem:[%s386 + $0x58] sm:$0xff]
        %v1678 = vld [vmem:[%s386 + $0x60] sm:$0xff]
        %v1679 = vld [vmem:[%s386 + $0x68] sm:$0xff]
        %v1680 = vld [vmem:[%s386 + $0x70] sm:$0xff]
        %v1681 = vld [vmem:[%s386 + $0x78] sm:$0xff]
        %v1682 = vld [vmem:[%s386 + $0x80] sm:$0xff]
        %v1683 = vld [vmem:[%s386 + $0x88] sm:$0xff]
        %v1684 = vld [vmem:[%s386 + $0x90] sm:$0xff]
        %v1685 = vld [vmem:[%s386 + $0x98] sm:$0xff]
        %v1686 = vld [vmem:[%s386 + $0xa0] sm:$0xff]
        %v1687 = vld [vmem:[%s386 + $0xa8] sm:$0xff]
        %v1688 = vld [vmem:[%s386 + $0xb0] sm:$0xff]
        %v1689 = vld [vmem:[%s386 + $0xb8] sm:$0xff]
        %v1690 = vld [vmem:[%s386 + $0xc0] sm:$0xff]
        %v1691 = vld [vmem:[%s386 + $0xc8] sm:$0xff]
        %v1692 = vld [vmem:[%s386 + $0xd0] sm:$0xff]
        %v1693 = vld [vmem:[%s386 + $0xd8] sm:$0xff]
        %v1694 = vld [vmem:[%s386 + $0xe0] sm:$0xff]
        %v1695 = vld [vmem:[%s386 + $0xe8] sm:$0xff]
        %v1696 = vld [vmem:[%s386 + $0xf0] sm:$0xff]
        %v1697 = vld [vmem:[%s386 + $0xf8] sm:$0xff]
        %1698 = vmatprep.subr.mxu0 0.0
        %1699 = vmatpush1.msra.mxu0 %v1666
        %1700 = vmatprep.subr.mxu0 0.0
        %1701 = vmatpush1.msra.mxu0 %v1667
        %1702 = vmatprep.subr.mxu0 0.0
        %1703 = vmatpush1.msra.mxu0 %v1668
        %1704 = vmatprep.subr.mxu0 0.0
        %1705 = vmatpush1.msra.mxu0 %v1669
        %1706 = vmatprep.subr.mxu0 0.0
        %1707 = vmatpush1.msra.mxu0 %v1670
        %1708 = vmatprep.subr.mxu0 0.0
        %1709 = vmatpush1.msra.mxu0 %v1671
        %1710 = vmatprep.subr.mxu0 0.0
        %1711 = vmatpush1.msra.mxu0 %v1672
        %1712 = vmatprep.subr.mxu0 0.0
        %1713 = vmatpush1.msra.mxu0 %v1673
        %1714 = vmatprep.subr.mxu0 0.0
        %1715 = vmatpush1.msra.mxu0 %v1674
        %1716 = vmatprep.subr.mxu0 0.0
        %1717 = vmatpush1.msra.mxu0 %v1675
        %1718 = vmatprep.subr.mxu0 0.0
        %1719 = vmatpush1.msra.mxu0 %v1676
        %1720 = vmatprep.subr.mxu0 0.0
        %1721 = vmatpush1.msra.mxu0 %v1677
        %1722 = vmatprep.subr.mxu0 0.0
        %1723 = vmatpush1.msra.mxu0 %v1678
        %1724 = vmatprep.subr.mxu0 0.0
        %1725 = vmatpush1.msra.mxu0 %v1679
        %1726 = vmatprep.subr.mxu0 0.0
        %1727 = vmatpush1.msra.mxu0 %v1680
        %1728 = vmatprep.subr.mxu0 0.0
        %1729 = vmatpush1.msra.mxu0 %v1681
        %1730 = vmatprep.subr.mxu0 0.0
        %1731 = vmatpush1.msra.mxu0 %v1682
        %1732 = vmatprep.subr.mxu0 0.0
        %1733 = vmatpush1.msra.mxu0 %v1683
        %1734 = vmatprep.subr.mxu0 0.0
        %1735 = vmatpush1.msra.mxu0 %v1684
        %1736 = vmatprep.subr.mxu0 0.0
        %1737 = vmatpush1.msra.mxu0 %v1685
        %1738 = vmatprep.subr.mxu0 0.0
        %1739 = vmatpush1.msra.mxu0 %v1686
        %1740 = vmatprep.subr.mxu0 0.0
        %1741 = vmatpush1.msra.mxu0 %v1687
        %1742 = vmatprep.subr.mxu0 0.0
        %1743 = vmatpush1.msra.mxu0 %v1688
        %1744 = vmatprep.subr.mxu0 0.0
        %1745 = vmatpush1.msra.mxu0 %v1689
        %1746 = vmatprep.subr.mxu0 0.0
        %1747 = vmatpush1.msra.mxu0 %v1690
        %1748 = vmatprep.subr.mxu0 0.0
        %1749 = vmatpush1.msra.mxu0 %v1691
        %1750 = vmatprep.subr.mxu0 0.0
        %1751 = vmatpush1.msra.mxu0 %v1692
        %1752 = vmatprep.subr.mxu0 0.0
        %1753 = vmatpush1.msra.mxu0 %v1693
        %1754 = vmatprep.subr.mxu0 0.0
        %1755 = vmatpush1.msra.mxu0 %v1694
        %1756 = vmatprep.subr.mxu0 0.0
        %1757 = vmatpush1.msra.mxu0 %v1695
        %1758 = vmatprep.subr.mxu0 0.0
        %1759 = vmatpush1.msra.mxu0 %v1696
        %1760 = vmatprep.subr.mxu0 0.0
        %1761 = vmatpush1.msra.mxu0 %v1697
        %1762 = vmatprep.mubr.f32.mxu0 %v1571
        %1763 = vmatmul.mubr.f32.gmra.mrb[0].mxu0 %v1570
        %v1764 = vpop.f32.mrb[0].mxu0
        %v1765 = vadd.f32 0.0, %v1764
        %v1766 = vpop.f32.mrb[0].mxu0
        %1767 = vmatprep.mubr.f32.mxu0 %v1573
        %1768 = vmatmul.mubr.f32.gmra.mrb[0].mxu0 %v1572
        %v1769 = vpop.f32.mrb[0].mxu0
        %v1770 = vadd.f32 0.0, %v1769
        %v1771 = vpop.f32.mrb[0].mxu0
        %1772 = vmatprep.mubr.f32.mxu0 %v1575
        %1773 = vmatmul.mubr.f32.gmra.mrb[0].mxu0 %v1574
        %v1774 = vpop.f32.mrb[0].mxu0
        %v1775 = vadd.f32 0.0, %v1774
        %v1776 = vpop.f32.mrb[0].mxu0
        %1777 = vmatprep.mubr.f32.mxu0 %v1577
        %1778 = vmatmul.mubr.f32.gmra.mrb[0].mxu0 %v1576
        %v1779 = vpop.f32.mrb[0].mxu0
        %v1780 = vadd.f32 0.0, %v1779
        %v1781 = vpop.f32.mrb[0].mxu0
        %1782 = vmatprep.mubr.f32.mxu0 %v1579
        %1783 = vmatmul.mubr.f32.gmra.mrb[0].mxu0 %v1578
        %v1784 = vpop.f32.mrb[0].mxu0
        %v1785 = vadd.f32 0.0, %v1784
        %v1786 = vpop.f32.mrb[0].mxu0
        %1787 = vmatprep.mubr.f32.mxu0 %v1581
        %1788 = vmatmul.mubr.f32.gmra.mrb[0].mxu0 %v1580
        %v1789 = vpop.f32.mrb[0].mxu0
        %v1790 = vadd.f32 0.0, %v1789
        %v1791 = vpop.f32.mrb[0].mxu0
        %1792 = vmatprep.mubr.f32.mxu0 %v1583
        %1793 = vmatmul.mubr.f32.gmra.mrb[0].mxu0 %v1582
        %v1794 = vpop.f32.mrb[0].mxu0
        %v1795 = vadd.f32 0.0, %v1794
        %v1796 = vpop.f32.mrb[0].mxu0
        %1797 = vmatprep.mubr.f32.mxu0 %v1585
        %1798 = vmatmul.mubr.f32.gmra.mrb[0].mxu0 %v1584
        %v1799 = vpop.f32.mrb[0].mxu0
        %v1800 = vadd.f32 0.0, %v1799
        %v1801 = vpop.f32.mrb[0].mxu0
        %1802 = vmatprep.mubr.f32.mxu0 %v1587
        %1803 = vmatmul.mubr.f32.gmra.mrb[0].mxu0 %v1586
        %v1804 = vpop.f32.mrb[0].mxu0
        %v1805 = vadd.f32 0.0, %v1804
        %v1806 = vpop.f32.mrb[0].mxu0
        %1807 = vmatprep.mubr.f32.mxu0 %v1589
        %1808 = vmatmul.mubr.f32.gmra.mrb[0].mxu0 %v1588
        %v1809 = vpop.f32.mrb[0].mxu0
        %v1810 = vadd.f32 0.0, %v1809
        %v1811 = vpop.f32.mrb[0].mxu0
        %1812 = vmatprep.mubr.f32.mxu0 %v1591
        %1813 = vmatmul.mubr.f32.gmra.mrb[0].mxu0 %v1590
        %v1814 = vpop.f32.mrb[0].mxu0
        %v1815 = vadd.f32 0.0, %v1814
        %v1816 = vpop.f32.mrb[0].mxu0
        %1817 = vmatprep.mubr.f32.mxu0 %v1593
        %1818 = vmatmul.mubr.f32.gmra.mrb[0].mxu0 %v1592
        %v1819 = vpop.f32.mrb[0].mxu0
        %v1820 = vadd.f32 0.0, %v1819
        %v1821 = vpop.f32.mrb[0].mxu0
        %1822 = vmatprep.mubr.f32.mxu0 %v1595
        %1823 = vmatmul.mubr.f32.gmra.mrb[0].mxu0 %v1594
        %v1824 = vpop.f32.mrb[0].mxu0
        %v1825 = vadd.f32 0.0, %v1824
        %v1826 = vpop.f32.mrb[0].mxu0
        %1827 = vmatprep.mubr.f32.mxu0 %v1597
        %1828 = vmatmul.mubr.f32.gmra.mrb[0].mxu0 %v1596
        %v1829 = vpop.f32.mrb[0].mxu0
        %v1830 = vadd.f32 0.0, %v1829
        %v1831 = vpop.f32.mrb[0].mxu0
        %1832 = vmatprep.mubr.f32.mxu0 %v1599
        %1833 = vmatmul.mubr.f32.gmra.mrb[0].mxu0 %v1598
        %v1834 = vpop.f32.mrb[0].mxu0
        %v1835 = vadd.f32 0.0, %v1834
        %v1836 = vpop.f32.mrb[0].mxu0
        %1837 = vmatprep.mubr.f32.mxu0 %v1601
        %1838 = vmatmul.mubr.f32.gmra.mrb[0].mxu0 %v1600
        %v1839 = vpop.f32.mrb[0].mxu0
        %v1840 = vadd.f32 0.0, %v1839
        %v1841 = vpop.f32.mrb[0].mxu0
        %1842 = vmatprep.mubr.f32.mxu0 %v1603
        %1843 = vmatmul.mubr.f32.gmra.mrb[0].mxu0 %v1602
        %v1844 = vpop.f32.mrb[0].mxu0
        %v1845 = vadd.f32 0.0, %v1844
        %v1846 = vpop.f32.mrb[0].mxu0
        %1847 = vmatprep.mubr.f32.mxu0 %v1605
        %1848 = vmatmul.mubr.f32.gmra.mrb[0].mxu0 %v1604
        %v1849 = vpop.f32.mrb[0].mxu0
        %v1850 = vadd.f32 0.0, %v1849
        %v1851 = vpop.f32.mrb[0].mxu0
        %1852 = vmatprep.mubr.f32.mxu0 %v1607
        %1853 = vmatmul.mubr.f32.gmra.mrb[0].mxu0 %v1606
        %v1854 = vpop.f32.mrb[0].mxu0
        %v1855 = vadd.f32 0.0, %v1854
        %v1856 = vpop.f32.mrb[0].mxu0
        %1857 = vmatprep.mubr.f32.mxu0 %v1609
        %1858 = vmatmul.mubr.f32.gmra.mrb[0].mxu0 %v1608
        %v1859 = vpop.f32.mrb[0].mxu0
        %v1860 = vadd.f32 0.0, %v1859
        %v1861 = vpop.f32.mrb[0].mxu0
        %1862 = vmatprep.mubr.f32.mxu0 %v1611
        %1863 = vmatmul.mubr.f32.gmra.mrb[0].mxu0 %v1610
        %v1864 = vpop.f32.mrb[0].mxu0
        %v1865 = vadd.f32 0.0, %v1864
        %v1866 = vpop.f32.mrb[0].mxu0
        %1867 = vmatprep.mubr.f32.mxu0 %v1613
        %1868 = vmatmul.mubr.f32.gmra.mrb[0].mxu0 %v1612
        %v1869 = vpop.f32.mrb[0].mxu0
        %v1870 = vadd.f32 0.0, %v1869
        %v1871 = vpop.f32.mrb[0].mxu0
        %1872 = vmatprep.mubr.f32.mxu0 %v1615
        %1873 = vmatmul.mubr.f32.gmra.mrb[0].mxu0 %v1614
        %v1874 = vpop.f32.mrb[0].mxu0
        %v1875 = vadd.f32 0.0, %v1874
        %v1876 = vpop.f32.mrb[0].mxu0
        %1877 = vmatprep.mubr.f32.mxu0 %v1617
        %1878 = vmatmul.mubr.f32.gmra.mrb[0].mxu0 %v1616
        %v1879 = vpop.f32.mrb[0].mxu0
        %v1880 = vadd.f32 0.0, %v1879
        %v1881 = vpop.f32.mrb[0].mxu0
        %1882 = vmatprep.mubr.f32.mxu0 %v1619
        %1883 = vmatmul.mubr.f32.gmra.mrb[0].mxu0 %v1618
        %v1884 = vpop.f32.mrb[0].mxu0
        %v1885 = vadd.f32 0.0, %v1884
        %v1886 = vpop.f32.mrb[0].mxu0
        %1887 = vmatprep.mubr.f32.mxu0 %v1621
        %1888 = vmatmul.mubr.f32.gmra.mrb[0].mxu0 %v1620
        %v1889 = vpop.f32.mrb[0].mxu0
        %v1890 = vadd.f32 0.0, %v1889
        %v1891 = vpop.f32.mrb[0].mxu0
        %1892 = vmatprep.mubr.f32.mxu0 %v1623
        %1893 = vmatmul.mubr.f32.gmra.mrb[0].mxu0 %v1622
        %v1894 = vpop.f32.mrb[0].mxu0
        %v1895 = vadd.f32 0.0, %v1894
        %v1896 = vpop.f32.mrb[0].mxu0
        %1897 = vmatprep.mubr.f32.mxu0 %v1625
        %1898 = vmatmul.mubr.f32.gmra.mrb[0].mxu0 %v1624
        %v1899 = vpop.f32.mrb[0].mxu0
        %v1900 = vadd.f32 0.0, %v1899
        %v1901 = vpop.f32.mrb[0].mxu0
        %1902 = vmatprep.mubr.f32.mxu0 %v1627
        %1903 = vmatmul.mubr.f32.gmra.mrb[0].mxu0 %v1626
        %v1904 = vpop.f32.mrb[0].mxu0
        %v1905 = vadd.f32 0.0, %v1904
        %v1906 = vpop.f32.mrb[0].mxu0
        %1907 = vmatprep.mubr.f32.mxu0 %v1629
        %1908 = vmatmul.mubr.f32.gmra.mrb[0].mxu0 %v1628
        %v1909 = vpop.f32.mrb[0].mxu0
        %v1910 = vadd.f32 0.0, %v1909
        %v1911 = vpop.f32.mrb[0].mxu0
        %1912 = vmatprep.mubr.f32.mxu0 %v1631
        %1913 = vmatmul.mubr.f32.gmra.mrb[0].mxu0 %v1630
        %v1914 = vpop.f32.mrb[0].mxu0
        %v1915 = vadd.f32 0.0, %v1914
        %v1916 = vpop.f32.mrb[0].mxu0
        %1917 = vmatprep.mubr.f32.mxu0 %v1633
        %1918 = vmatmul.mubr.f32.gmra.mrb[0].mxu0 %v1632
        %v1919 = vpop.f32.mrb[0].mxu0
        %v1920 = vadd.f32 0.0, %v1919
        %v1921 = vpop.f32.mrb[0].mxu0
        %1922 = vdwg.mxu0
        %v1923 = vadd.f32 %v1634, %v1765
        %v1924 = vadd.f32 %v1635, %v1770
        %v1925 = vadd.f32 %v1636, %v1775
        %v1926 = vadd.f32 %v1637, %v1780
        %v1927 = vadd.f32 %v1638, %v1785
        %v1928 = vadd.f32 %v1639, %v1790
        %v1929 = vadd.f32 %v1640, %v1795
        %v1930 = vadd.f32 %v1641, %v1800
        %v1931 = vadd.f32 %v1642, %v1805
        %v1932 = vadd.f32 %v1643, %v1810
        %v1933 = vadd.f32 %v1644, %v1815
        %v1934 = vadd.f32 %v1645, %v1820
        %v1935 = vadd.f32 %v1646, %v1825
        %v1936 = vadd.f32 %v1647, %v1830
        %v1937 = vadd.f32 %v1648, %v1835
        %v1938 = vadd.f32 %v1649, %v1840
        %v1939 = vadd.f32 %v1650, %v1845
        %v1940 = vadd.f32 %v1651, %v1850
        %v1941 = vadd.f32 %v1652, %v1855
        %v1942 = vadd.f32 %v1653, %v1860
        %v1943 = vadd.f32 %v1654, %v1865
        %v1944 = vadd.f32 %v1655, %v1870
        %v1945 = vadd.f32 %v1656, %v1875
        %v1946 = vadd.f32 %v1657, %v1880
        %v1947 = vadd.f32 %v1658, %v1885
        %v1948 = vadd.f32 %v1659, %v1890
        %v1949 = vadd.f32 %v1660, %v1895
        %v1950 = vadd.f32 %v1661, %v1900
        %v1951 = vadd.f32 %v1662, %v1905
        %v1952 = vadd.f32 %v1663, %v1910
        %v1953 = vadd.f32 %v1664, %v1915
        %v1954 = vadd.f32 %v1665, %v1920
        %1955 = vst [vmem:[#allocation10] sm:$0xff] %v1923
        %1956 = vst [vmem:[#allocation10 + $0x8] sm:$0xff] %v1924
        %1957 = vst [vmem:[#allocation10 + $0x10] sm:$0xff] %v1925
        %1958 = vst [vmem:[#allocation10 + $0x18] sm:$0xff] %v1926
        %1959 = vst [vmem:[#allocation10 + $0x20] sm:$0xff] %v1927
        %1960 = vst [vmem:[#allocation10 + $0x28] sm:$0xff] %v1928
        %1961 = vst [vmem:[#allocation10 + $0x30] sm:$0xff] %v1929
        %1962 = vst [vmem:[#allocation10 + $0x38] sm:$0xff] %v1930
        %1963 = vst [vmem:[#allocation10 + $0x40] sm:$0xff] %v1931
        %1964 = vst [vmem:[#allocation10 + $0x48] sm:$0xff] %v1932
        %1965 = vst [vmem:[#allocation10 + $0x50] sm:$0xff] %v1933
        %1966 = vst [vmem:[#allocation10 + $0x58] sm:$0xff] %v1934
        %1967 = vst [vmem:[#allocation10 + $0x60] sm:$0xff] %v1935
        %1968 = vst [vmem:[#allocation10 + $0x68] sm:$0xff] %v1936
        %1969 = vst [vmem:[#allocation10 + $0x70] sm:$0xff] %v1937
        %1970 = vst [vmem:[#allocation10 + $0x78] sm:$0xff] %v1938
        %1971 = vst [vmem:[#allocation10 + $0x80] sm:$0xff] %v1939
        %1972 = vst [vmem:[#allocation10 + $0x88] sm:$0xff] %v1940
        %1973 = vst [vmem:[#allocation10 + $0x90] sm:$0xff] %v1941
        %1974 = vst [vmem:[#allocation10 + $0x98] sm:$0xff] %v1942
        %1975 = vst [vmem:[#allocation10 + $0xa0] sm:$0xff] %v1943
        %1976 = vst [vmem:[#allocation10 + $0xa8] sm:$0xff] %v1944
        %1977 = vst [vmem:[#allocation10 + $0xb0] sm:$0xff] %v1945
        %1978 = vst [vmem:[#allocation10 + $0xb8] sm:$0xff] %v1946
        %1979 = vst [vmem:[#allocation10 + $0xc0] sm:$0xff] %v1947
        %1980 = vst [vmem:[#allocation10 + $0xc8] sm:$0xff] %v1948
        %1981 = vst [vmem:[#allocation10 + $0xd0] sm:$0xff] %v1949
        %1982 = vst [vmem:[#allocation10 + $0xd8] sm:$0xff] %v1950
        %1983 = vst [vmem:[#allocation10 + $0xe0] sm:$0xff] %v1951
        %1984 = vst [vmem:[#allocation10 + $0xe8] sm:$0xff] %v1952
        %1985 = vst [vmem:[#allocation10 + $0xf0] sm:$0xff] %v1953
        %1986 = vst [vmem:[#allocation10 + $0xf8] sm:$0xff] %v1954
        // Predicated region
        $region69: #{expert_forward.1} parent=47 // pred_check
          %p1987 = pneg %p233
        $region70: #{expert_forward.1} parent=47 // pred_check_branch
          %1989 = sbr.rel (%p1987) target = $region72
        $region71: #{expert_forward.1} parent=47 // pred_region
          %s1990 = smul.u32 32, %s30
          %s1992 = ssub.s32 4096, 4096
          %1993 = vsyncadd [#allocation4], %s1992
          %s1994 = smul.addr %s1990, 128
          %s1995 = scalar_lea.hbm %s7, %s1994
          %s1996 = sshll.u32 [#allocation10], 4
          %s1997 = int_to_ptr.vmem [resolvable:$true] %s1996
          %2002 = dma.vmem_to_hbm [thread:$0]  %s1997, 4096, %s1995, [#allocation4], 128, 128, 8
        $region72: #{expert_forward.1} parent=47 // pred_fallthru
          _
        // Predicated region
        $region73: #{expert_forward.1} parent=47 // pred_check
          %p2003 = pneg %p233
        $region74: #{expert_forward.1} parent=47 // pred_check_branch
          %2005 = sbr.rel (%p2003) target = $region76
        $region75: #{expert_forward.1} parent=47 // pred_region
          %2006 = dma.done [#allocation4], 4096
        $region76: #{expert_forward.1} parent=47 // pred_fallthru
          _
      $region48: #{expert_forward.1} parent=5 // pred_fallthru
        _
      %p2007 = scmp.le.s32.totalorder 2, %s21
      // Predicated region
      $region77: #{expert_forward.1} parent=5 // pred_check
        %p2008 = pneg %p2007
      $region78: #{expert_forward.1} parent=5 // pred_check_branch
        %2010 = sbr.rel (%p2008) target = $region80
      $region79: #{expert_forward.1} parent=5 // pred_region
        %s2011 = ssub.s32 %s21, 2
      $region80: #{expert_forward.1} parent=5 // pred_fallthru
        _
    $region6: #{expert_forward.1} parent=1 // loop_footer
      %s25 = sadd.s32 1, %s21
    $region7: #{expert_forward.1} parent=1 // loop_footer_branch
      %20 = sbr.rel target = $region3
    $region8: #{expert_forward.1} parent=1 // loop_exit
      _
    %2012 = vsyncpa [#allocation3], 1
    %s2013 = scalar_lea.sflag [#allocation3], 1
    %2014 = vsyncpa %s2013, 1
    %2015 = vsyncpa [#allocation6], 1
    %s2016 = scalar_lea.sflag [#allocation6], 1
    %2017 = vsyncpa %s2016, 1
    %2018 = vsyncpa [#allocation9], 1
    %s2019 = scalar_lea.sflag [#allocation9], 1
    %2020 = vsyncpa %s2019, 1
    %2021 = vsyncpa [#allocation4], 1
    %s2022 = scalar_lea.sflag [#allocation4], 1
    %2023 = vsyncpa %s2022, 1

</llo_original>
